<compile_context>
chip_gen: v7x
topology: tpu7x:2x2x1
jax: 0.10.0
libtpu: 0.0.40
codegen_flags: <defaults>
</compile_context>

<pallas_src>
import jax
import jax.numpy as jnp
from jax.experimental import pallas as pl
from jax.experimental.pallas import tpu as pltpu


def ae_kernel(
    x_ref,
    w1_ref,        # Linear(in, 512)
    w2_ref,        # Linear(512, 256) with BN(256) folded in
    w3_ref,        # Linear(256, 128) with BN(128) folded in
    w45_ref,       # fused Linear(128,64) @ Linear(64,128) bottleneck
    w6_ref,        # Linear(128, 256)
    w7_ref,        # Linear(256, in)
    bias_ref,      # all six biases concatenated: (1, 512+256+128+128+256+in)
    out_ref,
):
    cast = lambda h: h.astype(jnp.bfloat16)   # bf16 operands, f32 accumulate

    # Static, lane-aligned (multiples of 128) bias offsets into the packed buffer.
    offs = []
    o = 0
    for w in (w1_ref, w2_ref, w3_ref, w45_ref, w6_ref, w7_ref):
        offs.append(o)
        o += w.shape[1]

    def layer(h, w_ref, off, act=True):
        n = w_ref.shape[1]
        b = bias_ref[:, off:off + n]                       # (1, n) f32
        y = jnp.dot(cast(h), w_ref[...],
                    preferred_element_type=jnp.float32) + b
        if act:
            # LeakyReLU(0.2):  max(y, 0.2*y)  (2 VPU ops instead of cmp+mul+sel)
            y = jnp.maximum(y, 0.2 * y)
        return y

    h = x_ref[...]                    # Dropout(0.2) -> identity in eval mode
    h = layer(h, w1_ref, offs[0])     # encoder Linear(in,512)   + LeakyReLU
    h = layer(h, w2_ref, offs[1])     # Linear(512,256)+BN folded+ LeakyReLU
    h = layer(h, w3_ref, offs[2])     # Linear(256,128)+BN folded+ LeakyReLU
    h = layer(h, w45_ref, offs[3])    # fused bottleneck (128->64->128) + LeakyReLU
    h = layer(h, w6_ref, offs[4])     # decoder Linear(128,256)  + LeakyReLU
    h = layer(h, w7_ref, offs[5], act=False)   # decoder Linear(256,in)

    # sigmoid(h) == 0.5 * tanh(0.5*h) + 0.5  -> tanh rides the EUP slot.
    out_ref[...] = 0.5 * jnp.tanh(0.5 * h) + 0.5


def make_ae_params(key, input_len):
    """Deterministic PyTorch-style init (uniform(-1/sqrt(fan_in), 1/sqrt(fan_in)))."""
    dims = [
        (input_len, 512), (512, 256), (256, 128), (128, 64),   # encoder linears
        (64, 128), (128, 256), (256, input_len),               # decoder linears
    ]
    params = []
    for (fan_in, fan_out) in dims:
        key, kw, kb = jax.random.split(key, 3)
        bound = 1.0 / (fan_in ** 0.5)
        w = jax.random.uniform(kw, (fan_in, fan_out), jnp.float32, -bound, bound)
        b = jax.random.uniform(kb, (1, fan_out), jnp.float32, -bound, bound)
        params.append((w, b))

    # BatchNorm1d(256) and BatchNorm1d(128): gamma=1, beta=0, running stats (0, 1).
    eps = 1e-5
    bn = []
    for n in (256, 128):
        gamma = jnp.ones((1, n), jnp.float32)
        beta = jnp.zeros((1, n), jnp.float32)
        r_mean = jnp.zeros((1, n), jnp.float32)
        r_var = jnp.ones((1, n), jnp.float32)
        scale = gamma / jnp.sqrt(r_var + eps)
        shift = beta - r_mean * scale
        bn.append((scale, shift))
    return params, bn


def prepare_params(params, bn):
    """Fold BatchNorm into the preceding Linear, fuse the activation-free
    bottleneck pair, pack the biases into one buffer, and cast weights to bf16."""
    (w1, b1), (w2, b2), (w3, b3), (w4, b4), (w5, b5), (w6, b6), (w7, b7) = params
    (s1, t1), (s2, t2) = bn

    # BN folding:  (h @ W + b) * s + t  ==  h @ (W * s) + (b * s + t)
    w2f, b2f = w2 * s1, b2 * s1 + t1
    w3f, b3f = w3 * s2, b3 * s2 + t2

    # Bottleneck fusion (no nonlinearity between Linear(128,64) and Linear(64,128)).
    w45 = w4 @ w5                  # (128, 128)
    b45 = b4 @ w5 + b5             # (1, 128)

    bf16 = lambda w: w.astype(jnp.bfloat16)
    weights = (bf16(w1), bf16(w2f), bf16(w3f), bf16(w45), bf16(w6), bf16(w7))
    # Single packed bias buffer (f32), offsets 0/512/768/896/1024/1280 (lane-aligned).
    bias = jnp.concatenate([b1, b2f, b3f, b45, b6, b7], axis=1)
    return weights + (bias,)


def _choose_tile_b(B):
    """Batch-tile selection.

    * tiny / ragged batches: one grid step (launch-latency-bound regime).
    * 64 <= B <= 2048 (B % 16 == 0): exactly two 'parallel' steps so both of
      v7x's TensorCores get work; tile stays a multiple of 8.
    * larger B: biggest tile up to 1024 rows, preferring an even step count.
    """
    if B < 64 or B % 16 != 0:
        return B
    if B <= 2048:
        return B // 2
    for tb in (1024, 512, 256, 128, 64):
        if B % tb == 0 and (B // tb) % 2 == 0:
            return tb
    for tb in (1024, 512, 256, 128, 64, 32, 16, 8):
        if B % tb == 0:
            return tb
    return B


def _full_spec(shape):
    nd = len(shape)
    return pl.BlockSpec(shape, lambda i, _nd=nd: (0,) * _nd)


@jax.jit
def ae_forward(x, prepped):
    w1, w2, w3, w45, w6, w7, bias = prepped

    B, F = x.shape
    tile_b = _choose_tile_b(B)
    grid = (B // tile_b,)

    weight_arrays = (w1, w2, w3, w45, w6, w7, bias)
    in_specs = [pl.BlockSpec((tile_b, F), lambda i: (i, 0))] + [
        _full_spec(a.shape) for a in weight_arrays
    ]

    # Advisory cost model for XLA's scheduler.
    flops = 2 * B * (F * 512 + 512 * 256 + 256 * 128 + 128 * 128
                     + 128 * 256 + 256 * F)
    bytes_accessed = (2 * B * F * 4                       # x in + out (f32)
                      + sum(int(a.size) * a.dtype.itemsize for a in weight_arrays))
    transcendentals = B * F                               # final tanh
    cost = pl.CostEstimate(flops=flops,
                           bytes_accessed=bytes_accessed,
                           transcendentals=transcendentals)

    return pl.pallas_call(
        ae_kernel,
        out_shape=jax.ShapeDtypeStruct((B, F), jnp.float32),
        grid_spec=pltpu.PrefetchScalarGridSpec(
            num_scalar_prefetch=0,
            grid=grid,
            in_specs=in_specs,
            out_specs=pl.BlockSpec((tile_b, F), lambda i: (i, 0)),
        ),
        compiler_params=pltpu.CompilerParams(
            dimension_semantics=("parallel",),
            vmem_limit_bytes=32 * 1024 * 1024,
        ),
        cost_estimate=cost,
    )(x, *weight_arrays)


# ----------------------------- references ---------------------------------

def _ref_prepped(x, prepped):
    """Pure-JAX reference using the same folded/fused/bf16 parameters."""
    w1, w2, w3, w45, w6, w7, bias = prepped
    sizes = [w.shape[1] for w in (w1, w2, w3, w45, w6, w7)]
    offs, o = [], 0
    for n in sizes:
        offs.append(o)
        o += n
    bs = [bias[:, off:off + n] for off, n in zip(offs, sizes)]

    cast = lambda h: h.astype(jnp.bfloat16)
    lrelu = lambda h: jnp.maximum(h, 0.2 * h)
    h = x
    for w, b, act in zip((w1, w2, w3, w45, w6, w7), bs,
                         (True, True, True, True, True, False)):
        h = jnp.dot(cast(h), w, preferred_element_type=jnp.float32) + b
        if act:
            h = lrelu(h)
    return jax.nn.sigmoid(h)


def _ref_original_f32(x, params, bn):
    """Full-precision reference of the ORIGINAL (unfused, unfolded) module in eval mode."""
    (w1, b1), (w2, b2), (w3, b3), (w4, b4), (w5, b5), (w6, b6), (w7, b7) = params
    (s1, t1), (s2, t2) = bn
    lrelu = lambda h: jnp.where(h > 0, h, 0.2 * h)
    h = x                                   # Dropout -> identity (eval)
    h = lrelu(h @ w1 + b1)
    h = lrelu((h @ w2 + b2) * s1 + t1)      # BN(256) running stats
    h = lrelu((h @ w3 + b3) * s2 + t2)      # BN(128) running stats
    h = h @ w4 + b4                         # encoded (no activation)
    h = lrelu(h @ w5 + b5)
    h = lrelu(h @ w6 + b6)
    h = h @ w7 + b7
    return jax.nn.sigmoid(h)


if __name__ == "__main__":
    input_len = 128

    key = jax.random.PRNGKey(0)
    k_params, k_x1, k_x2 = jax.random.split(key, 3)

    params, bn = make_ae_params(k_params, input_len)
    prepped = prepare_params(params, bn)

    ok = True
    # Small batch (single grid step) and medium batch (two parallel grid steps).
    for kx, batch in ((k_x1, 16), (k_x2, 128)):
        x = jax.random.uniform(kx, (batch, input_len), jnp.float32)
        out = jax.block_until_ready(ae_forward(x, prepped))

        assert out.shape == (batch, input_len)
        # Strict check vs. the same prepped (bf16, folded, fused) parameters.
        exp_prepped = _ref_prepped(x, prepped)
        ok &= bool(jnp.allclose(out, exp_prepped, atol=5e-3, rtol=5e-3))
        # Looser check vs. the original unfused f32 module (validates folding/fusion;
        # slack covers bf16 weight quantization).
        exp_f32 = _ref_original_f32(x, params, bn)
        ok &= bool(jnp.allclose(out, exp_f32, atol=2e-2, rtol=2e-2))

    assert ok
    print("KERNEL_OK")
</pallas_src>

<mosaic_0001>
module attributes {stable_mosaic.version = 11 : i64} {
  func.func @ae_kernel(%arg0: i32, %arg1: memref<16x128xf32, #tpu.memory_space<vmem>>, %arg2: memref<128x512xbf16, #tpu.memory_space<vmem>>, %arg3: memref<512x256xbf16, #tpu.memory_space<vmem>>, %arg4: memref<256x128xbf16, #tpu.memory_space<vmem>>, %arg5: memref<128x128xbf16, #tpu.memory_space<vmem>>, %arg6: memref<128x256xbf16, #tpu.memory_space<vmem>>, %arg7: memref<256x128xbf16, #tpu.memory_space<vmem>>, %arg8: memref<1x1408xf32, #tpu.memory_space<vmem>>, %arg9: memref<16x128xf32, #tpu.memory_space<vmem>>) attributes {dimension_semantics = [#tpu.dimension_semantics<parallel>], iteration_bounds = array<i64: 1>, scalar_prefetch = 0 : i64, scratch_operands = 0 : i64, tpu.core_type = #tpu.core_type<tc>, window_params = [{transform_indices = @transform_0, window_bounds = array<i64: 16, 128>}, {pipeline_mode = #tpu.pipeline_mode<synchronous>, transform_indices = @transform_1, window_bounds = array<i64: 128, 512>}, {pipeline_mode = #tpu.pipeline_mode<synchronous>, transform_indices = @transform_2, window_bounds = array<i64: 512, 256>}, {pipeline_mode = #tpu.pipeline_mode<synchronous>, transform_indices = @transform_3, window_bounds = array<i64: 256, 128>}, {pipeline_mode = #tpu.pipeline_mode<synchronous>, transform_indices = @transform_4, window_bounds = array<i64: 128, 128>}, {pipeline_mode = #tpu.pipeline_mode<synchronous>, transform_indices = @transform_5, window_bounds = array<i64: 128, 256>}, {pipeline_mode = #tpu.pipeline_mode<synchronous>, transform_indices = @transform_6, window_bounds = array<i64: 256, 128>}, {pipeline_mode = #tpu.pipeline_mode<synchronous>, transform_indices = @transform_7, window_bounds = array<i64: 1, 1408>}, {transform_indices = @transform_8, window_bounds = array<i64: 16, 128>}]} {
    %c0 = arith.constant 0 : index
    %c0_0 = arith.constant 0 : index
    %0 = vector.load %arg1[%c0, %c0_0] : memref<16x128xf32, #tpu.memory_space<vmem>>, vector<16x128xf32>
    %c0_1 = arith.constant 0 : index
    %c0_2 = arith.constant 0 : index
    %1 = vector.load %arg8[%c0_1, %c0_2] : memref<1x1408xf32, #tpu.memory_space<vmem>>, vector<1x512xf32>
    %2 = arith.truncf %0 : vector<16x128xf32> to vector<16x128xbf16>
    %c0_3 = arith.constant 0 : index
    %c0_4 = arith.constant 0 : index
    %3 = vector.load %arg2[%c0_3, %c0_4] : memref<128x512xbf16, #tpu.memory_space<vmem>>, vector<128x512xbf16>
    %cst = arith.constant dense<0.000000e+00> : vector<16x512xf32>
    %4 = tpu.matmul %2, %3, %cst {dimension_numbers = #tpu.dot_dimension_numbers<[1], [0], [0], [1], [0, 0, 1, 1], [], []>} : vector<16x128xbf16>, vector<128x512xbf16>, vector<16x512xf32> -> vector<16x512xf32>
    %5 = vector.broadcast %1 : vector<1x512xf32> to vector<16x512xf32>
    %6 = arith.addf %4, %5 : vector<16x512xf32>
    %cst_5 = arith.constant 2.000000e-01 : f32
    %7 = vector.broadcast %cst_5 : f32 to vector<16x512xf32>
    %8 = arith.mulf %7, %6 : vector<16x512xf32>
    %9 = arith.maximumf %6, %8 : vector<16x512xf32>
    %c0_6 = arith.constant 0 : index
    %c512 = arith.constant 512 : index
    %10 = vector.load %arg8[%c0_6, %c512] : memref<1x1408xf32, #tpu.memory_space<vmem>>, vector<1x256xf32>
    %11 = arith.truncf %9 : vector<16x512xf32> to vector<16x512xbf16>
    %c0_7 = arith.constant 0 : index
    %c0_8 = arith.constant 0 : index
    %12 = vector.load %arg3[%c0_7, %c0_8] : memref<512x256xbf16, #tpu.memory_space<vmem>>, vector<512x256xbf16>
    %cst_9 = arith.constant dense<0.000000e+00> : vector<16x256xf32>
    %13 = tpu.matmul %11, %12, %cst_9 {dimension_numbers = #tpu.dot_dimension_numbers<[1], [0], [0], [1], [0, 0, 1, 1], [], []>} : vector<16x512xbf16>, vector<512x256xbf16>, vector<16x256xf32> -> vector<16x256xf32>
    %14 = vector.broadcast %10 : vector<1x256xf32> to vector<16x256xf32>
    %15 = arith.addf %13, %14 : vector<16x256xf32>
    %cst_10 = arith.constant 2.000000e-01 : f32
    %16 = vector.broadcast %cst_10 : f32 to vector<16x256xf32>
    %17 = arith.mulf %16, %15 : vector<16x256xf32>
    %18 = arith.maximumf %15, %17 : vector<16x256xf32>
    %c0_11 = arith.constant 0 : index
    %c768 = arith.constant 768 : index
    %19 = vector.load %arg8[%c0_11, %c768] : memref<1x1408xf32, #tpu.memory_space<vmem>>, vector<1x128xf32>
    %20 = arith.truncf %18 : vector<16x256xf32> to vector<16x256xbf16>
    %c0_12 = arith.constant 0 : index
    %c0_13 = arith.constant 0 : index
    %21 = vector.load %arg4[%c0_12, %c0_13] : memref<256x128xbf16, #tpu.memory_space<vmem>>, vector<256x128xbf16>
    %cst_14 = arith.constant dense<0.000000e+00> : vector<16x128xf32>
    %22 = tpu.matmul %20, %21, %cst_14 {dimension_numbers = #tpu.dot_dimension_numbers<[1], [0], [0], [1], [0, 0, 1, 1], [], []>} : vector<16x256xbf16>, vector<256x128xbf16>, vector<16x128xf32> -> vector<16x128xf32>
    %23 = vector.broadcast %19 : vector<1x128xf32> to vector<16x128xf32>
    %24 = arith.addf %22, %23 : vector<16x128xf32>
    %cst_15 = arith.constant 2.000000e-01 : f32
    %25 = vector.broadcast %cst_15 : f32 to vector<16x128xf32>
    %26 = arith.mulf %25, %24 : vector<16x128xf32>
    %27 = arith.maximumf %24, %26 : vector<16x128xf32>
    %c0_16 = arith.constant 0 : index
    %c896 = arith.constant 896 : index
    %28 = vector.load %arg8[%c0_16, %c896] : memref<1x1408xf32, #tpu.memory_space<vmem>>, vector<1x128xf32>
    %29 = arith.truncf %27 : vector<16x128xf32> to vector<16x128xbf16>
    %c0_17 = arith.constant 0 : index
    %c0_18 = arith.constant 0 : index
    %30 = vector.load %arg5[%c0_17, %c0_18] : memref<128x128xbf16, #tpu.memory_space<vmem>>, vector<128x128xbf16>
    %cst_19 = arith.constant dense<0.000000e+00> : vector<16x128xf32>
    %31 = tpu.matmul %29, %30, %cst_19 {dimension_numbers = #tpu.dot_dimension_numbers<[1], [0], [0], [1], [0, 0, 1, 1], [], []>} : vector<16x128xbf16>, vector<128x128xbf16>, vector<16x128xf32> -> vector<16x128xf32>
    %32 = vector.broadcast %28 : vector<1x128xf32> to vector<16x128xf32>
    %33 = arith.addf %31, %32 : vector<16x128xf32>
    %cst_20 = arith.constant 2.000000e-01 : f32
    %34 = vector.broadcast %cst_20 : f32 to vector<16x128xf32>
    %35 = arith.mulf %34, %33 : vector<16x128xf32>
    %36 = arith.maximumf %33, %35 : vector<16x128xf32>
    %c0_21 = arith.constant 0 : index
    %c1024 = arith.constant 1024 : index
    %37 = vector.load %arg8[%c0_21, %c1024] : memref<1x1408xf32, #tpu.memory_space<vmem>>, vector<1x256xf32>
    %38 = arith.truncf %36 : vector<16x128xf32> to vector<16x128xbf16>
    %c0_22 = arith.constant 0 : index
    %c0_23 = arith.constant 0 : index
    %39 = vector.load %arg6[%c0_22, %c0_23] : memref<128x256xbf16, #tpu.memory_space<vmem>>, vector<128x256xbf16>
    %cst_24 = arith.constant dense<0.000000e+00> : vector<16x256xf32>
    %40 = tpu.matmul %38, %39, %cst_24 {dimension_numbers = #tpu.dot_dimension_numbers<[1], [0], [0], [1], [0, 0, 1, 1], [], []>} : vector<16x128xbf16>, vector<128x256xbf16>, vector<16x256xf32> -> vector<16x256xf32>
    %41 = vector.broadcast %37 : vector<1x256xf32> to vector<16x256xf32>
    %42 = arith.addf %40, %41 : vector<16x256xf32>
    %cst_25 = arith.constant 2.000000e-01 : f32
    %43 = vector.broadcast %cst_25 : f32 to vector<16x256xf32>
    %44 = arith.mulf %43, %42 : vector<16x256xf32>
    %45 = arith.maximumf %42, %44 : vector<16x256xf32>
    %c0_26 = arith.constant 0 : index
    %c1280 = arith.constant 1280 : index
    %46 = vector.load %arg8[%c0_26, %c1280] : memref<1x1408xf32, #tpu.memory_space<vmem>>, vector<1x128xf32>
    %47 = arith.truncf %45 : vector<16x256xf32> to vector<16x256xbf16>
    %c0_27 = arith.constant 0 : index
    %c0_28 = arith.constant 0 : index
    %48 = vector.load %arg7[%c0_27, %c0_28] : memref<256x128xbf16, #tpu.memory_space<vmem>>, vector<256x128xbf16>
    %cst_29 = arith.constant dense<0.000000e+00> : vector<16x128xf32>
    %49 = tpu.matmul %47, %48, %cst_29 {dimension_numbers = #tpu.dot_dimension_numbers<[1], [0], [0], [1], [0, 0, 1, 1], [], []>} : vector<16x256xbf16>, vector<256x128xbf16>, vector<16x128xf32> -> vector<16x128xf32>
    %50 = vector.broadcast %46 : vector<1x128xf32> to vector<16x128xf32>
    %51 = arith.addf %49, %50 : vector<16x128xf32>
    %cst_30 = arith.constant 5.000000e-01 : f32
    %52 = vector.broadcast %cst_30 : f32 to vector<16x128xf32>
    %53 = arith.mulf %52, %51 : vector<16x128xf32>
    %54 = math.tanh %53 : vector<16x128xf32>
    %cst_31 = arith.constant 5.000000e-01 : f32
    %55 = vector.broadcast %cst_31 : f32 to vector<16x128xf32>
    %56 = arith.mulf %55, %54 : vector<16x128xf32>
    %cst_32 = arith.constant 5.000000e-01 : f32
    %57 = vector.broadcast %cst_32 : f32 to vector<16x128xf32>
    %58 = arith.addf %56, %57 : vector<16x128xf32>
    %c0_33 = arith.constant 0 : index
    %c0_34 = arith.constant 0 : index
    %59 = vector.load %arg9[%c0_33, %c0_34] : memref<16x128xf32, #tpu.memory_space<vmem>>, vector<16x128xf32>
    tpu.vector_store %arg9[%c0_33, %c0_34], %58 {strides = array<i32>} : memref<16x128xf32, #tpu.memory_space<vmem>>, vector<16x128xf32>,
    return
  }
  func.func @transform_0(%arg0: i32) -> (i32, i32) {
    %c0_i32 = arith.constant 0 : i32
    %c0_i32_0 = arith.constant 0 : i32
    return %arg0, %c0_i32 : i32, i32
  }
  func.func @transform_1(%arg0: i32) -> (i32, i32) {
    %c0_i32 = arith.constant 0 : i32
    %c0_i32_0 = arith.constant 0 : i32
    %c0_i32_1 = arith.constant 0 : i32
    return %c0_i32, %c0_i32_0 : i32, i32
  }
  func.func @transform_2(%arg0: i32) -> (i32, i32) {
    %c0_i32 = arith.constant 0 : i32
    %c0_i32_0 = arith.constant 0 : i32
    %c0_i32_1 = arith.constant 0 : i32
    return %c0_i32, %c0_i32_0 : i32, i32
  }
  func.func @transform_3(%arg0: i32) -> (i32, i32) {
    %c0_i32 = arith.constant 0 : i32
    %c0_i32_0 = arith.constant 0 : i32
    %c0_i32_1 = arith.constant 0 : i32
    return %c0_i32, %c0_i32_0 : i32, i32
  }
  func.func @transform_4(%arg0: i32) -> (i32, i32) {
    %c0_i32 = arith.constant 0 : i32
    %c0_i32_0 = arith.constant 0 : i32
    %c0_i32_1 = arith.constant 0 : i32
    return %c0_i32, %c0_i32_0 : i32, i32
  }
  func.func @transform_5(%arg0: i32) -> (i32, i32) {
    %c0_i32 = arith.constant 0 : i32
    %c0_i32_0 = arith.constant 0 : i32
    %c0_i32_1 = arith.constant 0 : i32
    return %c0_i32, %c0_i32_0 : i32, i32
  }
  func.func @transform_6(%arg0: i32) -> (i32, i32) {
    %c0_i32 = arith.constant 0 : i32
    %c0_i32_0 = arith.constant 0 : i32
    %c0_i32_1 = arith.constant 0 : i32
    return %c0_i32, %c0_i32_0 : i32, i32
  }
  func.func @transform_7(%arg0: i32) -> (i32, i32) {
    %c0_i32 = arith.constant 0 : i32
    %c0_i32_0 = arith.constant 0 : i32
    %c0_i32_1 = arith.constant 0 : i32
    return %c0_i32, %c0_i32_0 : i32, i32
  }
  func.func @transform_8(%arg0: i32) -> (i32, i32) {
    %c0_i32 = arith.constant 0 : i32
    %c0_i32_0 = arith.constant 0 : i32
    return %arg0, %c0_i32 : i32, i32
  }
}

</mosaic_0001>

<llo_original>
// kernel: ae_forward.1
$region0: #{ae_forward.1}
  #allocation0 [shape = 'u32[]', space=smem, size = 0x4, offset = 0x4, fixed_abs, tag = 'smem constant byte address 0x4 - core index']
  #allocation1 [shape = 'u32[144,128]{1,0:T(1,128)}', space=vmem, size = 0x12000, scoped, tag = 'internal scratch']
  %s0 = inlined_call_operand.hbm [shape: f32[16,128], index: 0, kind: input, shape index: {}]
  %s1 = inlined_call_operand.hbm [shape: bf16[128,512], index: 1, kind: input, shape index: {}]
  %s2 = inlined_call_operand.hbm [shape: bf16[512,256], index: 2, kind: input, shape index: {}]
  %s3 = inlined_call_operand.hbm [shape: bf16[256,128], index: 3, kind: input, shape index: {}]
  %s4 = inlined_call_operand.hbm [shape: bf16[128,128], index: 4, kind: input, shape index: {}]
  %s5 = inlined_call_operand.hbm [shape: bf16[128,256], index: 5, kind: input, shape index: {}]
  %s6 = inlined_call_operand.hbm [shape: bf16[256,128], index: 6, kind: input, shape index: {}]
  %s7 = inlined_call_operand.vmem [shape: f32[1,1408], index: 7, kind: input, shape index: {}]
  %s8 = inlined_call_operand.hbm [shape: f32[16,128], index: 8, kind: output, shape index: {}]
  %s9 = sld [smem:[#allocation0]]
  $region70: #{ae_forward.1} parent=0
    _
  %s11 = ssub.s32 1, %s9
  %s12 = scalar_select 0, %s11, %s9
  $region1: #{ae_forward.1} parent=0
    #allocation2 [shape = 'u8[8192]{0}', space=vmem, size = 0x2000, scoped, tag = 'input window, operand 0, single buffered']
    #allocation3 [shape = 's32[1]{0}', space=sflag, size = 0x4, scoped, tag = 'scoped memory for ae_forward.1']
    #allocation4 [shape = 's32[1]{0}', space=sflag, size = 0x4, scoped, tag = 'scoped memory for ae_forward.1']
    #allocation5 [shape = 'u8[131072]{0}', space=vmem, size = 0x20000, scoped, tag = 'input window, operand 1, single buffered']
    #allocation6 [shape = 's32[1]{0}', space=sflag, size = 0x4, scoped, tag = 'scoped memory for ae_forward.1']
    #allocation7 [shape = 'u8[262144]{0}', space=vmem, size = 0x40000, scoped, tag = 'input window, operand 2, single buffered']
    #allocation8 [shape = 'u8[65536]{0}', space=vmem, size = 0x10000, scoped, tag = 'input window, operand 3, single buffered']
    #allocation9 [shape = 's32[1]{0}', space=sflag, size = 0x4, scoped, tag = 'scoped memory for ae_forward.1']
    #allocation10 [shape = 'u8[32768]{0}', space=vmem, size = 0x8000, scoped, tag = 'input window, operand 4, single buffered']
    #allocation11 [shape = 'u8[65536]{0}', space=vmem, size = 0x10000, scoped, tag = 'input window, operand 5, single buffered']
    #allocation12 [shape = 's32[1]{0}', space=sflag, size = 0x4, scoped, tag = 'scoped memory for ae_forward.1']
    #allocation13 [shape = 'u8[65536]{0}', space=vmem, size = 0x10000, scoped, tag = 'input window, operand 6, single buffered']
    #allocation14 [shape = 'u8[8192]{0}', space=vmem, size = 0x2000, scoped, tag = 'output window, operand 0, single buffered']
    %13 = vsyncpa [#allocation3], 0
    %14 = vsyncpa [#allocation6], 0
    %15 = vsyncpa [#allocation9], 0
    %16 = vsyncpa [#allocation12], 0
    %17 = vsyncpa [#allocation4], 0
    // Predicated region
    $region2: #{ae_forward.1} parent=1 // pred_check
      _
    $region3: #{ae_forward.1} parent=1 // pred_check_branch
      %19 = sbr.rel (0) target = $region5
    $region4: #{ae_forward.1} parent=1 // pred_region
      %s21 = ssub.s32 256, 256
      %22 = vsyncadd [#allocation3], %s21
      %s23 = sshll.u32 [#allocation2], 4
      %s24 = int_to_ptr.vmem [resolvable:$true] %s23
      %29 = dma.hbm_to_vmem [thread:$0]  %s0, 256, %s24, [#allocation3], 128, 128, 8
    $region5: #{ae_forward.1} parent=1 // pred_fallthru
      _
    // Predicated region
    $region6: #{ae_forward.1} parent=1 // pred_check
      _
    $region7: #{ae_forward.1} parent=1 // pred_check_branch
      %31 = sbr.rel (0) target = $region9
    $region8: #{ae_forward.1} parent=1 // pred_region
      %s33 = ssub.s32 4096, 4096
      %34 = vsyncadd [#allocation6], %s33
      %s35 = sshll.u32 [#allocation5], 4
      %s36 = int_to_ptr.vmem [resolvable:$true] %s35
      %41 = dma.hbm_to_vmem [thread:$0]  %s1, 4096, %s36, [#allocation6], 256, 256, 16
    $region9: #{ae_forward.1} parent=1 // pred_fallthru
      _
    // Predicated region
    $region10: #{ae_forward.1} parent=1 // pred_check
      _
    $region11: #{ae_forward.1} parent=1 // pred_check_branch
      %43 = sbr.rel (0) target = $region13
    $region12: #{ae_forward.1} parent=1 // pred_region
      %s45 = ssub.s32 8192, 8192
      %46 = vsyncadd [#allocation6], %s45
      %s47 = sshll.u32 [#allocation7], 4
      %s48 = int_to_ptr.vmem [resolvable:$true] %s47
      %53 = dma.hbm_to_vmem [thread:$0]  %s2, 8192, %s48, [#allocation6], 128, 128, 8
    $region13: #{ae_forward.1} parent=1 // pred_fallthru
      _
    // Predicated region
    $region14: #{ae_forward.1} parent=1 // pred_check
      _
    $region15: #{ae_forward.1} parent=1 // pred_check_branch
      %55 = sbr.rel (0) target = $region17
    $region16: #{ae_forward.1} parent=1 // pred_region
      %s57 = ssub.s32 2048, 2048
      %58 = vsyncadd [#allocation9], %s57
      %s59 = sshll.u32 [#allocation8], 4
      %s60 = int_to_ptr.vmem [resolvable:$true] %s59
      %65 = dma.hbm_to_vmem [thread:$0]  %s3, 2048, %s60, [#allocation9], 64, 64, 4
    $region17: #{ae_forward.1} parent=1 // pred_fallthru
      _
    // Predicated region
    $region18: #{ae_forward.1} parent=1 // pred_check
      _
    $region19: #{ae_forward.1} parent=1 // pred_check_branch
      %67 = sbr.rel (0) target = $region21
    $region20: #{ae_forward.1} parent=1 // pred_region
      %s69 = ssub.s32 1024, 1024
      %70 = vsyncadd [#allocation9], %s69
      %s71 = sshll.u32 [#allocation10], 4
      %s72 = int_to_ptr.vmem [resolvable:$true] %s71
      %77 = dma.hbm_to_vmem [thread:$0]  %s4, 1024, %s72, [#allocation9], 64, 64, 4
    $region21: #{ae_forward.1} parent=1 // pred_fallthru
      _
    // Predicated region
    $region22: #{ae_forward.1} parent=1 // pred_check
      _
    $region23: #{ae_forward.1} parent=1 // pred_check_branch
      %79 = sbr.rel (0) target = $region25
    $region24: #{ae_forward.1} parent=1 // pred_region
      %s81 = ssub.s32 2048, 2048
      %82 = vsyncadd [#allocation12], %s81
      %s83 = sshll.u32 [#allocation11], 4
      %s84 = int_to_ptr.vmem [resolvable:$true] %s83
      %89 = dma.hbm_to_vmem [thread:$0]  %s5, 2048, %s84, [#allocation12], 128, 128, 8
    $region25: #{ae_forward.1} parent=1 // pred_fallthru
      _
    // Predicated region
    $region26: #{ae_forward.1} parent=1 // pred_check
      _
    $region27: #{ae_forward.1} parent=1 // pred_check_branch
      %91 = sbr.rel (0) target = $region29
    $region28: #{ae_forward.1} parent=1 // pred_region
      %s93 = ssub.s32 2048, 2048
      %94 = vsyncadd [#allocation12], %s93
      %s95 = sshll.u32 [#allocation13], 4
      %s96 = int_to_ptr.vmem [resolvable:$true] %s95
      %101 = dma.hbm_to_vmem [thread:$0]  %s6, 2048, %s96, [#allocation12], 64, 64, 4
    $region29: #{ae_forward.1} parent=1 // pred_fallthru
      _
    // Predicated region
    $region30: #{ae_forward.1} parent=1 // pred_check
      _
    $region31: #{ae_forward.1} parent=1 // pred_check_branch
      %103 = sbr.rel (0) target = $region33
    $region32: #{ae_forward.1} parent=1 // pred_region
      _
    $region33: #{ae_forward.1} parent=1 // pred_fallthru
      _
    // Predicated region
    $region34: #{ae_forward.1} parent=1 // pred_check
      _
    $region35: #{ae_forward.1} parent=1 // pred_check_branch
      %105 = sbr.rel (0) target = $region37
    $region36: #{ae_forward.1} parent=1 // pred_region
      %106 = dma.done [#allocation3], 256
    $region37: #{ae_forward.1} parent=1 // pred_fallthru
      _
    // Predicated region
    $region38: #{ae_forward.1} parent=1 // pred_check
      _
    $region39: #{ae_forward.1} parent=1 // pred_check_branch
      %108 = sbr.rel (0) target = $region41
    $region40: #{ae_forward.1} parent=1 // pred_region
      %109 = dma.done [#allocation6], 4096
    $region41: #{ae_forward.1} parent=1 // pred_fallthru
      _
    // Predicated region
    $region42: #{ae_forward.1} parent=1 // pred_check
      _
    $region43: #{ae_forward.1} parent=1 // pred_check_branch
      %111 = sbr.rel (0) target = $region45
    $region44: #{ae_forward.1} parent=1 // pred_region
      %112 = dma.done [#allocation6], 8192
    $region45: #{ae_forward.1} parent=1 // pred_fallthru
      _
    // Predicated region
    $region46: #{ae_forward.1} parent=1 // pred_check
      _
    $region47: #{ae_forward.1} parent=1 // pred_check_branch
      %114 = sbr.rel (0) target = $region49
    $region48: #{ae_forward.1} parent=1 // pred_region
      %115 = dma.done [#allocation9], 2048
    $region49: #{ae_forward.1} parent=1 // pred_fallthru
      _
    // Predicated region
    $region50: #{ae_forward.1} parent=1 // pred_check
      _
    $region51: #{ae_forward.1} parent=1 // pred_check_branch
      %117 = sbr.rel (0) target = $region53
    $region52: #{ae_forward.1} parent=1 // pred_region
      %118 = dma.done [#allocation9], 1024
    $region53: #{ae_forward.1} parent=1 // pred_fallthru
      _
    // Predicated region
    $region54: #{ae_forward.1} parent=1 // pred_check
      _
    $region55: #{ae_forward.1} parent=1 // pred_check_branch
      %120 = sbr.rel (0) target = $region57
    $region56: #{ae_forward.1} parent=1 // pred_region
      %121 = dma.done [#allocation12], 2048
    $region57: #{ae_forward.1} parent=1 // pred_fallthru
      _
    // Predicated region
    $region58: #{ae_forward.1} parent=1 // pred_check
      _
    $region59: #{ae_forward.1} parent=1 // pred_check_branch
      %123 = sbr.rel (0) target = $region61
    $region60: #{ae_forward.1} parent=1 // pred_region
      %124 = dma.done [#allocation12], 2048
    $region61: #{ae_forward.1} parent=1 // pred_fallthru
      _
    %v126 = vld [vmem:[#allocation2] sm:$0xff]
    %v127 = vld [vmem:[#allocation2 + $0x8] sm:$0xff]
    %v128 = vld [vmem:[%s7] sm:$0xf]
    %v129 = vpack.c.bf16 %v127, %v126
    %v130 = vld [vmem:[#allocation5] sm:$0xff]
    %v131 = vld [vmem:[#allocation5 + $0x8] sm:$0xff]
    %v132 = vld [vmem:[#allocation5 + $0x10] sm:$0xff]
    %v133 = vld [vmem:[#allocation5 + $0x18] sm:$0xff]
    %v134 = vld [vmem:[#allocation5 + $0x20] sm:$0xff]
    %v135 = vld [vmem:[#allocation5 + $0x28] sm:$0xff]
    %v136 = vld [vmem:[#allocation5 + $0x30] sm:$0xff]
    %v137 = vld [vmem:[#allocation5 + $0x38] sm:$0xff]
    %v138 = vld [vmem:[#allocation5 + $0x40] sm:$0xff]
    %v139 = vld [vmem:[#allocation5 + $0x48] sm:$0xff]
    %v140 = vld [vmem:[#allocation5 + $0x50] sm:$0xff]
    %v141 = vld [vmem:[#allocation5 + $0x58] sm:$0xff]
    %v142 = vld [vmem:[#allocation5 + $0x60] sm:$0xff]
    %v143 = vld [vmem:[#allocation5 + $0x68] sm:$0xff]
    %v144 = vld [vmem:[#allocation5 + $0x70] sm:$0xff]
    %v145 = vld [vmem:[#allocation5 + $0x78] sm:$0xff]
    %v146 = vld [vmem:[#allocation5 + $0x80] sm:$0xff]
    %v147 = vld [vmem:[#allocation5 + $0x88] sm:$0xff]
    %v148 = vld [vmem:[#allocation5 + $0x90] sm:$0xff]
    %v149 = vld [vmem:[#allocation5 + $0x98] sm:$0xff]
    %v150 = vld [vmem:[#allocation5 + $0xa0] sm:$0xff]
    %v151 = vld [vmem:[#allocation5 + $0xa8] sm:$0xff]
    %v152 = vld [vmem:[#allocation5 + $0xb0] sm:$0xff]
    %v153 = vld [vmem:[#allocation5 + $0xb8] sm:$0xff]
    %v154 = vld [vmem:[#allocation5 + $0xc0] sm:$0xff]
    %v155 = vld [vmem:[#allocation5 + $0xc8] sm:$0xff]
    %v156 = vld [vmem:[#allocation5 + $0xd0] sm:$0xff]
    %v157 = vld [vmem:[#allocation5 + $0xd8] sm:$0xff]
    %v158 = vld [vmem:[#allocation5 + $0xe0] sm:$0xff]
    %v159 = vld [vmem:[#allocation5 + $0xe8] sm:$0xff]
    %v160 = vld [vmem:[#allocation5 + $0xf0] sm:$0xff]
    %v161 = vld [vmem:[#allocation5 + $0xf8] sm:$0xff]
    %v163 = vlaneseq
    %v164 = vshrl.u32 %v163, 7
    %v165 = vsub.s32 0, %v164
    %v166 = vrot.slane %v128, %v165
    %v167 = vlaneseq
    %v168 = vshrl.u32 %v167, 7
    %v169 = vsub.s32 1, %v168
    %v170 = vrot.slane %v128, %v169
    %v171 = vlaneseq
    %v172 = vshrl.u32 %v171, 7
    %v173 = vsub.s32 2, %v172
    %v174 = vrot.slane %v128, %v173
    %v175 = vlaneseq
    %v176 = vshrl.u32 %v175, 7
    %v177 = vsub.s32 3, %v176
    %v178 = vrot.slane %v128, %v177
    %v215 = vunpack.c.l.b16 %v130
    %v216 = vunpack.c.h.b16 %v130
    %v217 = vunpack.c.l.b16 %v131
    %v218 = vunpack.c.h.b16 %v131
    %v219 = vunpack.c.l.b16 %v132
    %v220 = vunpack.c.h.b16 %v132
    %v221 = vunpack.c.l.b16 %v133
    %v222 = vunpack.c.h.b16 %v133
    %v223 = vunpack.c.l.b16 %v134
    %v224 = vunpack.c.h.b16 %v134
    %v225 = vunpack.c.l.b16 %v135
    %v226 = vunpack.c.h.b16 %v135
    %v227 = vunpack.c.l.b16 %v136
    %v228 = vunpack.c.h.b16 %v136
    %v229 = vunpack.c.l.b16 %v137
    %v230 = vunpack.c.h.b16 %v137
    %v231 = vunpack.c.l.b16 %v138
    %v232 = vunpack.c.h.b16 %v138
    %v233 = vunpack.c.l.b16 %v139
    %v234 = vunpack.c.h.b16 %v139
    %v235 = vunpack.c.l.b16 %v140
    %v236 = vunpack.c.h.b16 %v140
    %v237 = vunpack.c.l.b16 %v141
    %v238 = vunpack.c.h.b16 %v141
    %v239 = vunpack.c.l.b16 %v142
    %v240 = vunpack.c.h.b16 %v142
    %v241 = vunpack.c.l.b16 %v143
    %v242 = vunpack.c.h.b16 %v143
    %v243 = vunpack.c.l.b16 %v144
    %v244 = vunpack.c.h.b16 %v144
    %v245 = vunpack.c.l.b16 %v145
    %v246 = vunpack.c.h.b16 %v145
    %v247 = vunpack.c.l.b16 %v146
    %v248 = vunpack.c.h.b16 %v146
    %v249 = vunpack.c.l.b16 %v147
    %v250 = vunpack.c.h.b16 %v147
    %v251 = vunpack.c.l.b16 %v148
    %v252 = vunpack.c.h.b16 %v148
    %v253 = vunpack.c.l.b16 %v149
    %v254 = vunpack.c.h.b16 %v149
    %v255 = vunpack.c.l.b16 %v150
    %v256 = vunpack.c.h.b16 %v150
    %v257 = vunpack.c.l.b16 %v151
    %v258 = vunpack.c.h.b16 %v151
    %v259 = vunpack.c.l.b16 %v152
    %v260 = vunpack.c.h.b16 %v152
    %v261 = vunpack.c.l.b16 %v153
    %v262 = vunpack.c.h.b16 %v153
    %v263 = vunpack.c.l.b16 %v154
    %v264 = vunpack.c.h.b16 %v154
    %v265 = vunpack.c.l.b16 %v155
    %v266 = vunpack.c.h.b16 %v155
    %v267 = vunpack.c.l.b16 %v156
    %v268 = vunpack.c.h.b16 %v156
    %v269 = vunpack.c.l.b16 %v157
    %v270 = vunpack.c.h.b16 %v157
    %v271 = vunpack.c.l.b16 %v158
    %v272 = vunpack.c.h.b16 %v158
    %v273 = vunpack.c.l.b16 %v159
    %v274 = vunpack.c.h.b16 %v159
    %v275 = vunpack.c.l.b16 %v160
    %v276 = vunpack.c.h.b16 %v160
    %v277 = vunpack.c.l.b16 %v161
    %v278 = vunpack.c.h.b16 %v161
    %v279 = vpack.c.b16 %v219, %v215
    %v280 = vpack.c.b16 %v220, %v216
    %v281 = vpack.c.b16 %v221, %v217
    %v282 = vpack.c.b16 %v222, %v218
    %v283 = vpack.c.b16 %v227, %v223
    %v284 = vpack.c.b16 %v228, %v224
    %v285 = vpack.c.b16 %v229, %v225
    %v286 = vpack.c.b16 %v230, %v226
    %v287 = vpack.c.b16 %v235, %v231
    %v288 = vpack.c.b16 %v236, %v232
    %v289 = vpack.c.b16 %v237, %v233
    %v290 = vpack.c.b16 %v238, %v234
    %v291 = vpack.c.b16 %v243, %v239
    %v292 = vpack.c.b16 %v244, %v240
    %v293 = vpack.c.b16 %v245, %v241
    %v294 = vpack.c.b16 %v246, %v242
    %v295 = vpack.c.b16 %v251, %v247
    %v296 = vpack.c.b16 %v252, %v248
    %v297 = vpack.c.b16 %v253, %v249
    %v298 = vpack.c.b16 %v254, %v250
    %v299 = vpack.c.b16 %v259, %v255
    %v300 = vpack.c.b16 %v260, %v256
    %v301 = vpack.c.b16 %v261, %v257
    %v302 = vpack.c.b16 %v262, %v258
    %v303 = vpack.c.b16 %v267, %v263
    %v304 = vpack.c.b16 %v268, %v264
    %v305 = vpack.c.b16 %v269, %v265
    %v306 = vpack.c.b16 %v270, %v266
    %v307 = vpack.c.b16 %v275, %v271
    %v308 = vpack.c.b16 %v276, %v272
    %v309 = vpack.c.b16 %v277, %v273
    %v310 = vpack.c.b16 %v278, %v274
    %343 = vmatprep.subr.bf16.mxu0 %v280
    %344 = vmatpush1.bf16.msra.mxu0 %v279
    %345 = vmatprep.subr.bf16.mxu0 %v284
    %346 = vmatpush1.bf16.msra.mxu0 %v283
    %347 = vmatprep.subr.bf16.mxu0 %v288
    %348 = vmatpush1.bf16.msra.mxu0 %v287
    %349 = vmatprep.subr.bf16.mxu0 %v292
    %350 = vmatpush1.bf16.msra.mxu0 %v291
    %351 = vmatprep.subr.bf16.mxu0 %v296
    %352 = vmatpush1.bf16.msra.mxu0 %v295
    %353 = vmatprep.subr.bf16.mxu0 %v300
    %354 = vmatpush1.bf16.msra.mxu0 %v299
    %355 = vmatprep.subr.bf16.mxu0 %v304
    %356 = vmatpush1.bf16.msra.mxu0 %v303
    %357 = vmatprep.subr.bf16.mxu0 %v308
    %358 = vmatpush1.bf16.msra.mxu0 %v307
    %359 = vmatprep.subr.bf16.mxu0 0
    %360 = vmatpush1.bf16.msra.mxu0 0
    %361 = vmatprep.subr.bf16.mxu0 0
    %362 = vmatpush1.bf16.msra.mxu0 0
    %363 = vmatprep.subr.bf16.mxu0 0
    %364 = vmatpush1.bf16.msra.mxu0 0
    %365 = vmatprep.subr.bf16.mxu0 0
    %366 = vmatpush1.bf16.msra.mxu0 0
    %367 = vmatprep.subr.bf16.mxu0 0
    %368 = vmatpush1.bf16.msra.mxu0 0
    %369 = vmatprep.subr.bf16.mxu0 0
    %370 = vmatpush1.bf16.msra.mxu0 0
    %371 = vmatprep.subr.bf16.mxu0 0
    %372 = vmatpush1.bf16.msra.mxu0 0
    %373 = vmatprep.subr.bf16.mxu0 0
    %374 = vmatpush1.bf16.msra.mxu0 0
    %375 = vmatprep.mubr.bf16.mxu0 0
    %376 = vmatmul.mubr.bf16.gmra.mrb[0].mxu0 %v129
    %v377 = vpop.f32.mrb[0].mxu0
    %v378 = vadd.f32 %v166, %v377
    %v379 = vpop.f32.mrb[0].mxu0
    %v380 = vadd.f32 %v170, %v379
    %v381 = vpop.f32.mrb[0].mxu0
    %v382 = vadd.f32 %v166, %v381
    %v383 = vpop.f32.mrb[0].mxu0
    %v384 = vadd.f32 %v170, %v383
    %385 = vdwg.mxu0
    %386 = vmatprep.subr.bf16.mxu0 %v282
    %387 = vmatpush1.bf16.msra.mxu0 %v281
    %388 = vmatprep.subr.bf16.mxu0 %v286
    %389 = vmatpush1.bf16.msra.mxu0 %v285
    %390 = vmatprep.subr.bf16.mxu0 %v290
    %391 = vmatpush1.bf16.msra.mxu0 %v289
    %392 = vmatprep.subr.bf16.mxu0 %v294
    %393 = vmatpush1.bf16.msra.mxu0 %v293
    %394 = vmatprep.subr.bf16.mxu0 %v298
    %395 = vmatpush1.bf16.msra.mxu0 %v297
    %396 = vmatprep.subr.bf16.mxu0 %v302
    %397 = vmatpush1.bf16.msra.mxu0 %v301
    %398 = vmatprep.subr.bf16.mxu0 %v306
    %399 = vmatpush1.bf16.msra.mxu0 %v305
    %400 = vmatprep.subr.bf16.mxu0 %v310
    %401 = vmatpush1.bf16.msra.mxu0 %v309
    %402 = vmatprep.subr.bf16.mxu0 0
    %403 = vmatpush1.bf16.msra.mxu0 0
    %404 = vmatprep.subr.bf16.mxu0 0
    %405 = vmatpush1.bf16.msra.mxu0 0
    %406 = vmatprep.subr.bf16.mxu0 0
    %407 = vmatpush1.bf16.msra.mxu0 0
    %408 = vmatprep.subr.bf16.mxu0 0
    %409 = vmatpush1.bf16.msra.mxu0 0
    %410 = vmatprep.subr.bf16.mxu0 0
    %411 = vmatpush1.bf16.msra.mxu0 0
    %412 = vmatprep.subr.bf16.mxu0 0
    %413 = vmatpush1.bf16.msra.mxu0 0
    %414 = vmatprep.subr.bf16.mxu0 0
    %415 = vmatpush1.bf16.msra.mxu0 0
    %416 = vmatprep.subr.bf16.mxu0 0
    %417 = vmatpush1.bf16.msra.mxu0 0
    %418 = vmatprep.mubr.bf16.mxu0 0
    %419 = vmatmul.mubr.bf16.gmra.mrb[0].mxu0 %v129
    %v420 = vpop.f32.mrb[0].mxu0
    %v421 = vadd.f32 %v174, %v420
    %v422 = vpop.f32.mrb[0].mxu0
    %v423 = vadd.f32 %v178, %v422
    %v424 = vpop.f32.mrb[0].mxu0
    %v425 = vadd.f32 %v174, %v424
    %v426 = vpop.f32.mrb[0].mxu0
    %v427 = vadd.f32 %v178, %v426
    %428 = vdwg.mxu0
    %v429 = vmul.f32 %v378, 0.2
    %v430 = vmul.f32 %v380, 0.2
    %v431 = vmul.f32 %v421, 0.2
    %v432 = vmul.f32 %v423, 0.2
    %v433 = vmul.f32 %v382, 0.2
    %v434 = vmul.f32 %v384, 0.2
    %v435 = vmul.f32 %v425, 0.2
    %v436 = vmul.f32 %v427, 0.2
    %v437 = vmax.f32 %v378, %v429
    %v438 = vmax.f32 %v380, %v430
    %v439 = vmax.f32 %v421, %v431
    %v440 = vmax.f32 %v423, %v432
    %v441 = vmax.f32 %v382, %v433
    %v442 = vmax.f32 %v384, %v434
    %v443 = vmax.f32 %v425, %v435
    %v444 = vmax.f32 %v427, %v436
    %v445 = vld [vmem:[%s7 + $0x4] sm:$0x3]
    %v446 = vpack.c.bf16 %v441, %v437
    %v447 = vpack.c.bf16 %v442, %v438
    %v448 = vpack.c.bf16 %v443, %v439
    %v449 = vpack.c.bf16 %v444, %v440
    %v450 = vld [vmem:[#allocation7] sm:$0xff]
    %v451 = vld [vmem:[#allocation7 + $0x8] sm:$0xff]
    %v452 = vld [vmem:[#allocation7 + $0x10] sm:$0xff]
    %v453 = vld [vmem:[#allocation7 + $0x18] sm:$0xff]
    %v454 = vld [vmem:[#allocation7 + $0x20] sm:$0xff]
    %v455 = vld [vmem:[#allocation7 + $0x28] sm:$0xff]
    %v456 = vld [vmem:[#allocation7 + $0x30] sm:$0xff]
    %v457 = vld [vmem:[#allocation7 + $0x38] sm:$0xff]
    %v458 = vld [vmem:[#allocation7 + $0x40] sm:$0xff]
    %v459 = vld [vmem:[#allocation7 + $0x48] sm:$0xff]
    %v460 = vld [vmem:[#allocation7 + $0x50] sm:$0xff]
    %v461 = vld [vmem:[#allocation7 + $0x58] sm:$0xff]
    %v462 = vld [vmem:[#allocation7 + $0x60] sm:$0xff]
    %v463 = vld [vmem:[#allocation7 + $0x68] sm:$0xff]
    %v464 = vld [vmem:[#allocation7 + $0x70] sm:$0xff]
    %v465 = vld [vmem:[#allocation7 + $0x78] sm:$0xff]
    %v466 = vld [vmem:[#allocation7 + $0x80] sm:$0xff]
    %v467 = vld [vmem:[#allocation7 + $0x88] sm:$0xff]
    %v468 = vld [vmem:[#allocation7 + $0x90] sm:$0xff]
    %v469 = vld [vmem:[#allocation7 + $0x98] sm:$0xff]
    %v470 = vld [vmem:[#allocation7 + $0xa0] sm:$0xff]
    %v471 = vld [vmem:[#allocation7 + $0xa8] sm:$0xff]
    %v472 = vld [vmem:[#allocation7 + $0xb0] sm:$0xff]
    %v473 = vld [vmem:[#allocation7 + $0xb8] sm:$0xff]
    %v474 = vld [vmem:[#allocation7 + $0xc0] sm:$0xff]
    %v475 = vld [vmem:[#allocation7 + $0xc8] sm:$0xff]
    %v476 = vld [vmem:[#allocation7 + $0xd0] sm:$0xff]
    %v477 = vld [vmem:[#allocation7 + $0xd8] sm:$0xff]
    %v478 = vld [vmem:[#allocation7 + $0xe0] sm:$0xff]
    %v479 = vld [vmem:[#allocation7 + $0xe8] sm:$0xff]
    %v480 = vld [vmem:[#allocation7 + $0xf0] sm:$0xff]
    %v481 = vld [vmem:[#allocation7 + $0xf8] sm:$0xff]
    %v482 = vld [vmem:[#allocation7 + $0x100] sm:$0xff]
    %v483 = vld [vmem:[#allocation7 + $0x108] sm:$0xff]
    %v484 = vld [vmem:[#allocation7 + $0x110] sm:$0xff]
    %v485 = vld [vmem:[#allocation7 + $0x118] sm:$0xff]
    %v486 = vld [vmem:[#allocation7 + $0x120] sm:$0xff]
    %v487 = vld [vmem:[#allocation7 + $0x128] sm:$0xff]
    %v488 = vld [vmem:[#allocation7 + $0x130] sm:$0xff]
    %v489 = vld [vmem:[#allocation7 + $0x138] sm:$0xff]
    %v490 = vld [vmem:[#allocation7 + $0x140] sm:$0xff]
    %v491 = vld [vmem:[#allocation7 + $0x148] sm:$0xff]
    %v492 = vld [vmem:[#allocation7 + $0x150] sm:$0xff]
    %v493 = vld [vmem:[#allocation7 + $0x158] sm:$0xff]
    %v494 = vld [vmem:[#allocation7 + $0x160] sm:$0xff]
    %v495 = vld [vmem:[#allocation7 + $0x168] sm:$0xff]
    %v496 = vld [vmem:[#allocation7 + $0x170] sm:$0xff]
    %v497 = vld [vmem:[#allocation7 + $0x178] sm:$0xff]
    %v498 = vld [vmem:[#allocation7 + $0x180] sm:$0xff]
    %v499 = vld [vmem:[#allocation7 + $0x188] sm:$0xff]
    %v500 = vld [vmem:[#allocation7 + $0x190] sm:$0xff]
    %v501 = vld [vmem:[#allocation7 + $0x198] sm:$0xff]
    %v502 = vld [vmem:[#allocation7 + $0x1a0] sm:$0xff]
    %v503 = vld [vmem:[#allocation7 + $0x1a8] sm:$0xff]
    %v504 = vld [vmem:[#allocation7 + $0x1b0] sm:$0xff]
    %v505 = vld [vmem:[#allocation7 + $0x1b8] sm:$0xff]
    %v506 = vld [vmem:[#allocation7 + $0x1c0] sm:$0xff]
    %v507 = vld [vmem:[#allocation7 + $0x1c8] sm:$0xff]
    %v508 = vld [vmem:[#allocation7 + $0x1d0] sm:$0xff]
    %v509 = vld [vmem:[#allocation7 + $0x1d8] sm:$0xff]
    %v510 = vld [vmem:[#allocation7 + $0x1e0] sm:$0xff]
    %v511 = vld [vmem:[#allocation7 + $0x1e8] sm:$0xff]
    %v512 = vld [vmem:[#allocation7 + $0x1f0] sm:$0xff]
    %v513 = vld [vmem:[#allocation7 + $0x1f8] sm:$0xff]
    %v515 = vlaneseq
    %v516 = vshrl.u32 %v515, 7
    %v517 = vsub.s32 0, %v516
    %v518 = vrot.slane %v445, %v517
    %v519 = vlaneseq
    %v520 = vshrl.u32 %v519, 7
    %v521 = vsub.s32 1, %v520
    %v522 = vrot.slane %v445, %v521
    %v589 = vunpack.c.l.b16 %v450
    %v590 = vunpack.c.h.b16 %v450
    %v591 = vunpack.c.l.b16 %v451
    %v592 = vunpack.c.h.b16 %v451
    %v593 = vunpack.c.l.b16 %v452
    %v594 = vunpack.c.h.b16 %v452
    %v595 = vunpack.c.l.b16 %v453
    %v596 = vunpack.c.h.b16 %v453
    %v597 = vunpack.c.l.b16 %v454
    %v598 = vunpack.c.h.b16 %v454
    %v599 = vunpack.c.l.b16 %v455
    %v600 = vunpack.c.h.b16 %v455
    %v601 = vunpack.c.l.b16 %v456
    %v602 = vunpack.c.h.b16 %v456
    %v603 = vunpack.c.l.b16 %v457
    %v604 = vunpack.c.h.b16 %v457
    %v605 = vunpack.c.l.b16 %v458
    %v606 = vunpack.c.h.b16 %v458
    %v607 = vunpack.c.l.b16 %v459
    %v608 = vunpack.c.h.b16 %v459
    %v609 = vunpack.c.l.b16 %v460
    %v610 = vunpack.c.h.b16 %v460
    %v611 = vunpack.c.l.b16 %v461
    %v612 = vunpack.c.h.b16 %v461
    %v613 = vunpack.c.l.b16 %v462
    %v614 = vunpack.c.h.b16 %v462
    %v615 = vunpack.c.l.b16 %v463
    %v616 = vunpack.c.h.b16 %v463
    %v617 = vunpack.c.l.b16 %v464
    %v618 = vunpack.c.h.b16 %v464
    %v619 = vunpack.c.l.b16 %v465
    %v620 = vunpack.c.h.b16 %v465
    %v621 = vunpack.c.l.b16 %v466
    %v622 = vunpack.c.h.b16 %v466
    %v623 = vunpack.c.l.b16 %v467
    %v624 = vunpack.c.h.b16 %v467
    %v625 = vunpack.c.l.b16 %v468
    %v626 = vunpack.c.h.b16 %v468
    %v627 = vunpack.c.l.b16 %v469
    %v628 = vunpack.c.h.b16 %v469
    %v629 = vunpack.c.l.b16 %v470
    %v630 = vunpack.c.h.b16 %v470
    %v631 = vunpack.c.l.b16 %v471
    %v632 = vunpack.c.h.b16 %v471
    %v633 = vunpack.c.l.b16 %v472
    %v634 = vunpack.c.h.b16 %v472
    %v635 = vunpack.c.l.b16 %v473
    %v636 = vunpack.c.h.b16 %v473
    %v637 = vunpack.c.l.b16 %v474
    %v638 = vunpack.c.h.b16 %v474
    %v639 = vunpack.c.l.b16 %v475
    %v640 = vunpack.c.h.b16 %v475
    %v641 = vunpack.c.l.b16 %v476
    %v642 = vunpack.c.h.b16 %v476
    %v643 = vunpack.c.l.b16 %v477
    %v644 = vunpack.c.h.b16 %v477
    %v645 = vunpack.c.l.b16 %v478
    %v646 = vunpack.c.h.b16 %v478
    %v647 = vunpack.c.l.b16 %v479
    %v648 = vunpack.c.h.b16 %v479
    %v649 = vunpack.c.l.b16 %v480
    %v650 = vunpack.c.h.b16 %v480
    %v651 = vunpack.c.l.b16 %v481
    %v652 = vunpack.c.h.b16 %v481
    %v653 = vunpack.c.l.b16 %v482
    %v654 = vunpack.c.h.b16 %v482
    %v655 = vunpack.c.l.b16 %v483
    %v656 = vunpack.c.h.b16 %v483
    %v657 = vunpack.c.l.b16 %v484
    %v658 = vunpack.c.h.b16 %v484
    %v659 = vunpack.c.l.b16 %v485
    %v660 = vunpack.c.h.b16 %v485
    %v661 = vunpack.c.l.b16 %v486
    %v662 = vunpack.c.h.b16 %v486
    %v663 = vunpack.c.l.b16 %v487
    %v664 = vunpack.c.h.b16 %v487
    %v665 = vunpack.c.l.b16 %v488
    %v666 = vunpack.c.h.b16 %v488
    %v667 = vunpack.c.l.b16 %v489
    %v668 = vunpack.c.h.b16 %v489
    %v669 = vunpack.c.l.b16 %v490
    %v670 = vunpack.c.h.b16 %v490
    %v671 = vunpack.c.l.b16 %v491
    %v672 = vunpack.c.h.b16 %v491
    %v673 = vunpack.c.l.b16 %v492
    %v674 = vunpack.c.h.b16 %v492
    %v675 = vunpack.c.l.b16 %v493
    %v676 = vunpack.c.h.b16 %v493
    %v677 = vunpack.c.l.b16 %v494
    %v678 = vunpack.c.h.b16 %v494
    %v679 = vunpack.c.l.b16 %v495
    %v680 = vunpack.c.h.b16 %v495
    %v681 = vunpack.c.l.b16 %v496
    %v682 = vunpack.c.h.b16 %v496
    %v683 = vunpack.c.l.b16 %v497
    %v684 = vunpack.c.h.b16 %v497
    %v685 = vunpack.c.l.b16 %v498
    %v686 = vunpack.c.h.b16 %v498
    %v687 = vunpack.c.l.b16 %v499
    %v688 = vunpack.c.h.b16 %v499
    %v689 = vunpack.c.l.b16 %v500
    %v690 = vunpack.c.h.b16 %v500
    %v691 = vunpack.c.l.b16 %v501
    %v692 = vunpack.c.h.b16 %v501
    %v693 = vunpack.c.l.b16 %v502
    %v694 = vunpack.c.h.b16 %v502
    %v695 = vunpack.c.l.b16 %v503
    %v696 = vunpack.c.h.b16 %v503
    %v697 = vunpack.c.l.b16 %v504
    %v698 = vunpack.c.h.b16 %v504
    %v699 = vunpack.c.l.b16 %v505
    %v700 = vunpack.c.h.b16 %v505
    %v701 = vunpack.c.l.b16 %v506
    %v702 = vunpack.c.h.b16 %v506
    %v703 = vunpack.c.l.b16 %v507
    %v704 = vunpack.c.h.b16 %v507
    %v705 = vunpack.c.l.b16 %v508
    %v706 = vunpack.c.h.b16 %v508
    %v707 = vunpack.c.l.b16 %v509
    %v708 = vunpack.c.h.b16 %v509
    %v709 = vunpack.c.l.b16 %v510
    %v710 = vunpack.c.h.b16 %v510
    %v711 = vunpack.c.l.b16 %v511
    %v712 = vunpack.c.h.b16 %v511
    %v713 = vunpack.c.l.b16 %v512
    %v714 = vunpack.c.h.b16 %v512
    %v715 = vunpack.c.l.b16 %v513
    %v716 = vunpack.c.h.b16 %v513
    %v717 = vpack.c.b16 %v591, %v589
    %v718 = vpack.c.b16 %v592, %v590
    %v719 = vpack.c.b16 %v595, %v593
    %v720 = vpack.c.b16 %v596, %v594
    %v721 = vpack.c.b16 %v599, %v597
    %v722 = vpack.c.b16 %v600, %v598
    %v723 = vpack.c.b16 %v603, %v601
    %v724 = vpack.c.b16 %v604, %v602
    %v725 = vpack.c.b16 %v607, %v605
    %v726 = vpack.c.b16 %v608, %v606
    %v727 = vpack.c.b16 %v611, %v609
    %v728 = vpack.c.b16 %v612, %v610
    %v729 = vpack.c.b16 %v615, %v613
    %v730 = vpack.c.b16 %v616, %v614
    %v731 = vpack.c.b16 %v619, %v617
    %v732 = vpack.c.b16 %v620, %v618
    %v733 = vpack.c.b16 %v623, %v621
    %v734 = vpack.c.b16 %v624, %v622
    %v735 = vpack.c.b16 %v627, %v625
    %v736 = vpack.c.b16 %v628, %v626
    %v737 = vpack.c.b16 %v631, %v629
    %v738 = vpack.c.b16 %v632, %v630
    %v739 = vpack.c.b16 %v635, %v633
    %v740 = vpack.c.b16 %v636, %v634
    %v741 = vpack.c.b16 %v639, %v637
    %v742 = vpack.c.b16 %v640, %v638
    %v743 = vpack.c.b16 %v643, %v641
    %v744 = vpack.c.b16 %v644, %v642
    %v745 = vpack.c.b16 %v647, %v645
    %v746 = vpack.c.b16 %v648, %v646
    %v747 = vpack.c.b16 %v651, %v649
    %v748 = vpack.c.b16 %v652, %v650
    %v749 = vpack.c.b16 %v655, %v653
    %v750 = vpack.c.b16 %v656, %v654
    %v751 = vpack.c.b16 %v659, %v657
    %v752 = vpack.c.b16 %v660, %v658
    %v753 = vpack.c.b16 %v663, %v661
    %v754 = vpack.c.b16 %v664, %v662
    %v755 = vpack.c.b16 %v667, %v665
    %v756 = vpack.c.b16 %v668, %v666
    %v757 = vpack.c.b16 %v671, %v669
    %v758 = vpack.c.b16 %v672, %v670
    %v759 = vpack.c.b16 %v675, %v673
    %v760 = vpack.c.b16 %v676, %v674
    %v761 = vpack.c.b16 %v679, %v677
    %v762 = vpack.c.b16 %v680, %v678
    %v763 = vpack.c.b16 %v683, %v681
    %v764 = vpack.c.b16 %v684, %v682
    %v765 = vpack.c.b16 %v687, %v685
    %v766 = vpack.c.b16 %v688, %v686
    %v767 = vpack.c.b16 %v691, %v689
    %v768 = vpack.c.b16 %v692, %v690
    %v769 = vpack.c.b16 %v695, %v693
    %v770 = vpack.c.b16 %v696, %v694
    %v771 = vpack.c.b16 %v699, %v697
    %v772 = vpack.c.b16 %v700, %v698
    %v773 = vpack.c.b16 %v703, %v701
    %v774 = vpack.c.b16 %v704, %v702
    %v775 = vpack.c.b16 %v707, %v705
    %v776 = vpack.c.b16 %v708, %v706
    %v777 = vpack.c.b16 %v711, %v709
    %v778 = vpack.c.b16 %v712, %v710
    %v779 = vpack.c.b16 %v715, %v713
    %v780 = vpack.c.b16 %v716, %v714
    %845 = vmatprep.subr.bf16.mxu0 %v718
    %846 = vmatpush1.bf16.msra.mxu0 %v717
    %847 = vmatprep.subr.bf16.mxu0 %v720
    %848 = vmatpush1.bf16.msra.mxu0 %v719
    %849 = vmatprep.subr.bf16.mxu0 %v722
    %850 = vmatpush1.bf16.msra.mxu0 %v721
    %851 = vmatprep.subr.bf16.mxu0 %v724
    %852 = vmatpush1.bf16.msra.mxu0 %v723
    %853 = vmatprep.subr.bf16.mxu0 %v726
    %854 = vmatpush1.bf16.msra.mxu0 %v725
    %855 = vmatprep.subr.bf16.mxu0 %v728
    %856 = vmatpush1.bf16.msra.mxu0 %v727
    %857 = vmatprep.subr.bf16.mxu0 %v730
    %858 = vmatpush1.bf16.msra.mxu0 %v729
    %859 = vmatprep.subr.bf16.mxu0 %v732
    %860 = vmatpush1.bf16.msra.mxu0 %v731
    %861 = vmatprep.subr.bf16.mxu0 %v734
    %862 = vmatpush1.bf16.msra.mxu0 %v733
    %863 = vmatprep.subr.bf16.mxu0 %v736
    %864 = vmatpush1.bf16.msra.mxu0 %v735
    %865 = vmatprep.subr.bf16.mxu0 %v738
    %866 = vmatpush1.bf16.msra.mxu0 %v737
    %867 = vmatprep.subr.bf16.mxu0 %v740
    %868 = vmatpush1.bf16.msra.mxu0 %v739
    %869 = vmatprep.subr.bf16.mxu0 %v742
    %870 = vmatpush1.bf16.msra.mxu0 %v741
    %871 = vmatprep.subr.bf16.mxu0 %v744
    %872 = vmatpush1.bf16.msra.mxu0 %v743
    %873 = vmatprep.subr.bf16.mxu0 %v746
    %874 = vmatpush1.bf16.msra.mxu0 %v745
    %875 = vmatprep.subr.bf16.mxu0 %v748
    %876 = vmatpush1.bf16.msra.mxu0 %v747
    %877 = vmatprep.mubr.bf16.mxu0 %v447
    %878 = vmatmul.mubr.bf16.gmra.mrb[0].mxu0 %v446
    %v879 = vpop.f32.mrb[0].mxu0
    %v880 = vadd.f32 %v518, %v879
    %v881 = vpop.f32.mrb[0].mxu0
    %v882 = vadd.f32 %v522, %v881
    %v883 = vpop.f32.mrb[0].mxu0
    %v884 = vadd.f32 %v518, %v883
    %v885 = vpop.f32.mrb[0].mxu0
    %v886 = vadd.f32 %v522, %v885
    %887 = vdwg.mxu0
    %888 = vmatprep.subr.bf16.mxu0 %v750
    %889 = vmatpush1.bf16.msra.mxu0 %v749
    %890 = vmatprep.subr.bf16.mxu0 %v752
    %891 = vmatpush1.bf16.msra.mxu0 %v751
    %892 = vmatprep.subr.bf16.mxu0 %v754
    %893 = vmatpush1.bf16.msra.mxu0 %v753
    %894 = vmatprep.subr.bf16.mxu0 %v756
    %895 = vmatpush1.bf16.msra.mxu0 %v755
    %896 = vmatprep.subr.bf16.mxu0 %v758
    %897 = vmatpush1.bf16.msra.mxu0 %v757
    %898 = vmatprep.subr.bf16.mxu0 %v760
    %899 = vmatpush1.bf16.msra.mxu0 %v759
    %900 = vmatprep.subr.bf16.mxu0 %v762
    %901 = vmatpush1.bf16.msra.mxu0 %v761
    %902 = vmatprep.subr.bf16.mxu0 %v764
    %903 = vmatpush1.bf16.msra.mxu0 %v763
    %904 = vmatprep.subr.bf16.mxu0 %v766
    %905 = vmatpush1.bf16.msra.mxu0 %v765
    %906 = vmatprep.subr.bf16.mxu0 %v768
    %907 = vmatpush1.bf16.msra.mxu0 %v767
    %908 = vmatprep.subr.bf16.mxu0 %v770
    %909 = vmatpush1.bf16.msra.mxu0 %v769
    %910 = vmatprep.subr.bf16.mxu0 %v772
    %911 = vmatpush1.bf16.msra.mxu0 %v771
    %912 = vmatprep.subr.bf16.mxu0 %v774
    %913 = vmatpush1.bf16.msra.mxu0 %v773
    %914 = vmatprep.subr.bf16.mxu0 %v776
    %915 = vmatpush1.bf16.msra.mxu0 %v775
    %916 = vmatprep.subr.bf16.mxu0 %v778
    %917 = vmatpush1.bf16.msra.mxu0 %v777
    %918 = vmatprep.subr.bf16.mxu0 %v780
    %919 = vmatpush1.bf16.msra.mxu0 %v779
    %920 = vmatprep.mubr.bf16.mxu0 %v449
    %921 = vmatmul.mubr.bf16.gmra.mrb[0].mxu0 %v448
    %v922 = vpop.f32.mrb[0].mxu0
    %v923 = vadd.f32 %v880, %v922
    %v924 = vpop.f32.mrb[0].mxu0
    %v925 = vadd.f32 %v882, %v924
    %v926 = vpop.f32.mrb[0].mxu0
    %v927 = vadd.f32 %v884, %v926
    %v928 = vpop.f32.mrb[0].mxu0
    %v929 = vadd.f32 %v886, %v928
    %930 = vdwg.mxu0
    %v931 = vmul.f32 %v923, 0.2
    %v932 = vmul.f32 %v925, 0.2
    %v933 = vmul.f32 %v927, 0.2
    %v934 = vmul.f32 %v929, 0.2
    %v935 = vmax.f32 %v923, %v931
    %v936 = vmax.f32 %v925, %v932
    %v937 = vmax.f32 %v927, %v933
    %v938 = vmax.f32 %v929, %v934
    %v939 = vld [vmem:[%s7 + $0x6] sm:$0x1]
    %v940 = vpack.c.bf16 %v937, %v935
    %v941 = vpack.c.bf16 %v938, %v936
    %v942 = vld [vmem:[#allocation8] sm:$0xf]
    %v943 = vld [vmem:[#allocation8 + $0x4] sm:$0xf]
    %v944 = vld [vmem:[#allocation8 + $0x8] sm:$0xf]
    %v945 = vld [vmem:[#allocation8 + $0xc] sm:$0xf]
    %v946 = vld [vmem:[#allocation8 + $0x10] sm:$0xf]
    %v947 = vld [vmem:[#allocation8 + $0x14] sm:$0xf]
    %v948 = vld [vmem:[#allocation8 + $0x18] sm:$0xf]
    %v949 = vld [vmem:[#allocation8 + $0x1c] sm:$0xf]
    %v950 = vld [vmem:[#allocation8 + $0x20] sm:$0xf]
    %v951 = vld [vmem:[#allocation8 + $0x24] sm:$0xf]
    %v952 = vld [vmem:[#allocation8 + $0x28] sm:$0xf]
    %v953 = vld [vmem:[#allocation8 + $0x2c] sm:$0xf]
    %v954 = vld [vmem:[#allocation8 + $0x30] sm:$0xf]
    %v955 = vld [vmem:[#allocation8 + $0x34] sm:$0xf]
    %v956 = vld [vmem:[#allocation8 + $0x38] sm:$0xf]
    %v957 = vld [vmem:[#allocation8 + $0x3c] sm:$0xf]
    %v958 = vld [vmem:[#allocation8 + $0x40] sm:$0xf]
    %v959 = vld [vmem:[#allocation8 + $0x44] sm:$0xf]
    %v960 = vld [vmem:[#allocation8 + $0x48] sm:$0xf]
    %v961 = vld [vmem:[#allocation8 + $0x4c] sm:$0xf]
    %v962 = vld [vmem:[#allocation8 + $0x50] sm:$0xf]
    %v963 = vld [vmem:[#allocation8 + $0x54] sm:$0xf]
    %v964 = vld [vmem:[#allocation8 + $0x58] sm:$0xf]
    %v965 = vld [vmem:[#allocation8 + $0x5c] sm:$0xf]
    %v966 = vld [vmem:[#allocation8 + $0x60] sm:$0xf]
    %v967 = vld [vmem:[#allocation8 + $0x64] sm:$0xf]
    %v968 = vld [vmem:[#allocation8 + $0x68] sm:$0xf]
    %v969 = vld [vmem:[#allocation8 + $0x6c] sm:$0xf]
    %v970 = vld [vmem:[#allocation8 + $0x70] sm:$0xf]
    %v971 = vld [vmem:[#allocation8 + $0x74] sm:$0xf]
    %v972 = vld [vmem:[#allocation8 + $0x78] sm:$0xf]
    %v973 = vld [vmem:[#allocation8 + $0x7c] sm:$0xf]
    %v975 = vlaneseq
    %v976 = vshrl.u32 %v975, 7
    %v977 = vsub.s32 0, %v976
    %v978 = vrot.slane %v939, %v977
    %v1012 = vunpack.c.l.b16 %v942
    %v1013 = vunpack.c.l.b16 %v943
    %v1014 = vunpack.c.l.b16 %v944
    %v1015 = vunpack.c.l.b16 %v945
    %v1016 = vunpack.c.l.b16 %v946
    %v1017 = vunpack.c.l.b16 %v947
    %v1018 = vunpack.c.l.b16 %v948
    %v1019 = vunpack.c.l.b16 %v949
    %v1020 = vunpack.c.l.b16 %v950
    %v1021 = vunpack.c.l.b16 %v951
    %v1022 = vunpack.c.l.b16 %v952
    %v1023 = vunpack.c.l.b16 %v953
    %v1024 = vunpack.c.l.b16 %v954
    %v1025 = vunpack.c.l.b16 %v955
    %v1026 = vunpack.c.l.b16 %v956
    %v1027 = vunpack.c.l.b16 %v957
    %v1028 = vunpack.c.l.b16 %v958
    %v1029 = vunpack.c.l.b16 %v959
    %v1030 = vunpack.c.l.b16 %v960
    %v1031 = vunpack.c.l.b16 %v961
    %v1032 = vunpack.c.l.b16 %v962
    %v1033 = vunpack.c.l.b16 %v963
    %v1034 = vunpack.c.l.b16 %v964
    %v1035 = vunpack.c.l.b16 %v965
    %v1036 = vunpack.c.l.b16 %v966
    %v1037 = vunpack.c.l.b16 %v967
    %v1038 = vunpack.c.l.b16 %v968
    %v1039 = vunpack.c.l.b16 %v969
    %v1040 = vunpack.c.l.b16 %v970
    %v1041 = vunpack.c.l.b16 %v971
    %v1042 = vunpack.c.l.b16 %v972
    %v1043 = vunpack.c.l.b16 %v973
    %v1044 = vpack.c.b16 %v1013, %v1012
    %v1045 = vpack.c.b16 %v1015, %v1014
    %v1046 = vpack.c.b16 %v1017, %v1016
    %v1047 = vpack.c.b16 %v1019, %v1018
    %v1048 = vpack.c.b16 %v1021, %v1020
    %v1049 = vpack.c.b16 %v1023, %v1022
    %v1050 = vpack.c.b16 %v1025, %v1024
    %v1051 = vpack.c.b16 %v1027, %v1026
    %v1052 = vpack.c.b16 %v1029, %v1028
    %v1053 = vpack.c.b16 %v1031, %v1030
    %v1054 = vpack.c.b16 %v1033, %v1032
    %v1055 = vpack.c.b16 %v1035, %v1034
    %v1056 = vpack.c.b16 %v1037, %v1036
    %v1057 = vpack.c.b16 %v1039, %v1038
    %v1058 = vpack.c.b16 %v1041, %v1040
    %v1059 = vpack.c.b16 %v1043, %v1042
    %1076 = vmatprep.subr.bf16.mxu0 0
    %1077 = vmatpush1.bf16.msra.mxu0 %v1044
    %1078 = vmatprep.subr.bf16.mxu0 0
    %1079 = vmatpush1.bf16.msra.mxu0 %v1045
    %1080 = vmatprep.subr.bf16.mxu0 0
    %1081 = vmatpush1.bf16.msra.mxu0 %v1046
    %1082 = vmatprep.subr.bf16.mxu0 0
    %1083 = vmatpush1.bf16.msra.mxu0 %v1047
    %1084 = vmatprep.subr.bf16.mxu0 0
    %1085 = vmatpush1.bf16.msra.mxu0 %v1048
    %1086 = vmatprep.subr.bf16.mxu0 0
    %1087 = vmatpush1.bf16.msra.mxu0 %v1049
    %1088 = vmatprep.subr.bf16.mxu0 0
    %1089 = vmatpush1.bf16.msra.mxu0 %v1050
    %1090 = vmatprep.subr.bf16.mxu0 0
    %1091 = vmatpush1.bf16.msra.mxu0 %v1051
    %1092 = vmatprep.subr.bf16.mxu0 0
    %1093 = vmatpush1.bf16.msra.mxu0 %v1052
    %1094 = vmatprep.subr.bf16.mxu0 0
    %1095 = vmatpush1.bf16.msra.mxu0 %v1053
    %1096 = vmatprep.subr.bf16.mxu0 0
    %1097 = vmatpush1.bf16.msra.mxu0 %v1054
    %1098 = vmatprep.subr.bf16.mxu0 0
    %1099 = vmatpush1.bf16.msra.mxu0 %v1055
    %1100 = vmatprep.subr.bf16.mxu0 0
    %1101 = vmatpush1.bf16.msra.mxu0 %v1056
    %1102 = vmatprep.subr.bf16.mxu0 0
    %1103 = vmatpush1.bf16.msra.mxu0 %v1057
    %1104 = vmatprep.subr.bf16.mxu0 0
    %1105 = vmatpush1.bf16.msra.mxu0 %v1058
    %1106 = vmatprep.subr.bf16.mxu0 0
    %1107 = vmatpush1.bf16.msra.mxu0 %v1059
    %1108 = vmatprep.mubr.bf16.mxu0 %v941
    %1109 = vmatmul.mubr.bf16.gmra.mrb[0].mxu0 %v940
    %v1110 = vpop.f32.mrb[0].mxu0
    %v1111 = vadd.f32 %v978, %v1110
    %v1112 = vpop.f32.mrb[0].mxu0
    %v1113 = vpop.f32.mrb[0].mxu0
    %v1114 = vadd.f32 %v978, %v1113
    %v1115 = vpop.f32.mrb[0].mxu0
    %1116 = vdwg.mxu0
    %v1117 = vmul.f32 %v1111, 0.2
    %v1118 = vmul.f32 %v1114, 0.2
    %v1119 = vmax.f32 %v1111, %v1117
    %v1120 = vmax.f32 %v1114, %v1118
    %v1121 = vld [vmem:[%s7 + $0x7] sm:$0x1]
    %v1122 = vpack.c.bf16 %v1120, %v1119
    %v1123 = vld [vmem:[#allocation10] sm:$0xf]
    %v1124 = vld [vmem:[#allocation10 + $0x4] sm:$0xf]
    %v1125 = vld [vmem:[#allocation10 + $0x8] sm:$0xf]
    %v1126 = vld [vmem:[#allocation10 + $0xc] sm:$0xf]
    %v1127 = vld [vmem:[#allocation10 + $0x10] sm:$0xf]
    %v1128 = vld [vmem:[#allocation10 + $0x14] sm:$0xf]
    %v1129 = vld [vmem:[#allocation10 + $0x18] sm:$0xf]
    %v1130 = vld [vmem:[#allocation10 + $0x1c] sm:$0xf]
    %v1131 = vld [vmem:[#allocation10 + $0x20] sm:$0xf]
    %v1132 = vld [vmem:[#allocation10 + $0x24] sm:$0xf]
    %v1133 = vld [vmem:[#allocation10 + $0x28] sm:$0xf]
    %v1134 = vld [vmem:[#allocation10 + $0x2c] sm:$0xf]
    %v1135 = vld [vmem:[#allocation10 + $0x30] sm:$0xf]
    %v1136 = vld [vmem:[#allocation10 + $0x34] sm:$0xf]
    %v1137 = vld [vmem:[#allocation10 + $0x38] sm:$0xf]
    %v1138 = vld [vmem:[#allocation10 + $0x3c] sm:$0xf]
    %v1140 = vlaneseq
    %v1141 = vshrl.u32 %v1140, 7
    %v1142 = vsub.s32 0, %v1141
    %v1143 = vrot.slane %v1121, %v1142
    %v1161 = vunpack.c.l.b16 %v1123
    %v1162 = vunpack.c.l.b16 %v1124
    %v1163 = vunpack.c.l.b16 %v1125
    %v1164 = vunpack.c.l.b16 %v1126
    %v1165 = vunpack.c.l.b16 %v1127
    %v1166 = vunpack.c.l.b16 %v1128
    %v1167 = vunpack.c.l.b16 %v1129
    %v1168 = vunpack.c.l.b16 %v1130
    %v1169 = vunpack.c.l.b16 %v1131
    %v1170 = vunpack.c.l.b16 %v1132
    %v1171 = vunpack.c.l.b16 %v1133
    %v1172 = vunpack.c.l.b16 %v1134
    %v1173 = vunpack.c.l.b16 %v1135
    %v1174 = vunpack.c.l.b16 %v1136
    %v1175 = vunpack.c.l.b16 %v1137
    %v1176 = vunpack.c.l.b16 %v1138
    %v1177 = vpack.c.b16 %v1162, %v1161
    %v1178 = vpack.c.b16 %v1164, %v1163
    %v1179 = vpack.c.b16 %v1166, %v1165
    %v1180 = vpack.c.b16 %v1168, %v1167
    %v1181 = vpack.c.b16 %v1170, %v1169
    %v1182 = vpack.c.b16 %v1172, %v1171
    %v1183 = vpack.c.b16 %v1174, %v1173
    %v1184 = vpack.c.b16 %v1176, %v1175
    %1193 = vmatprep.subr.bf16.mxu0 0
    %1194 = vmatpush1.bf16.msra.mxu0 %v1177
    %1195 = vmatprep.subr.bf16.mxu0 0
    %1196 = vmatpush1.bf16.msra.mxu0 %v1178
    %1197 = vmatprep.subr.bf16.mxu0 0
    %1198 = vmatpush1.bf16.msra.mxu0 %v1179
    %1199 = vmatprep.subr.bf16.mxu0 0
    %1200 = vmatpush1.bf16.msra.mxu0 %v1180
    %1201 = vmatprep.subr.bf16.mxu0 0
    %1202 = vmatpush1.bf16.msra.mxu0 %v1181
    %1203 = vmatprep.subr.bf16.mxu0 0
    %1204 = vmatpush1.bf16.msra.mxu0 %v1182
    %1205 = vmatprep.subr.bf16.mxu0 0
    %1206 = vmatpush1.bf16.msra.mxu0 %v1183
    %1207 = vmatprep.subr.bf16.mxu0 0
    %1208 = vmatpush1.bf16.msra.mxu0 %v1184
    %1209 = vmatprep.subr.bf16.mxu0 0
    %1210 = vmatpush1.bf16.msra.mxu0 0
    %1211 = vmatprep.subr.bf16.mxu0 0
    %1212 = vmatpush1.bf16.msra.mxu0 0
    %1213 = vmatprep.subr.bf16.mxu0 0
    %1214 = vmatpush1.bf16.msra.mxu0 0
    %1215 = vmatprep.subr.bf16.mxu0 0
    %1216 = vmatpush1.bf16.msra.mxu0 0
    %1217 = vmatprep.subr.bf16.mxu0 0
    %1218 = vmatpush1.bf16.msra.mxu0 0
    %1219 = vmatprep.subr.bf16.mxu0 0
    %1220 = vmatpush1.bf16.msra.mxu0 0
    %1221 = vmatprep.subr.bf16.mxu0 0
    %1222 = vmatpush1.bf16.msra.mxu0 0
    %1223 = vmatprep.subr.bf16.mxu0 0
    %1224 = vmatpush1.bf16.msra.mxu0 0
    %1225 = vmatprep.mubr.bf16.mxu0 0
    %1226 = vmatmul.mubr.bf16.gmra.mrb[0].mxu0 %v1122
    %v1227 = vpop.f32.mrb[0].mxu0
    %v1228 = vadd.f32 %v1143, %v1227
    %v1229 = vpop.f32.mrb[0].mxu0
    %v1230 = vpop.f32.mrb[0].mxu0
    %v1231 = vadd.f32 %v1143, %v1230
    %v1232 = vpop.f32.mrb[0].mxu0
    %1233 = vdwg.mxu0
    %v1234 = vmul.f32 %v1228, 0.2
    %v1235 = vmul.f32 %v1231, 0.2
    %v1236 = vmax.f32 %v1228, %v1234
    %v1237 = vmax.f32 %v1231, %v1235
    %v1238 = vld [vmem:[%s7 + $0x8] sm:$0x3]
    %v1239 = vpack.c.bf16 %v1237, %v1236
    %v1240 = vld [vmem:[#allocation11] sm:$0xff]
    %v1241 = vld [vmem:[#allocation11 + $0x8] sm:$0xff]
    %v1242 = vld [vmem:[#allocation11 + $0x10] sm:$0xff]
    %v1243 = vld [vmem:[#allocation11 + $0x18] sm:$0xff]
    %v1244 = vld [vmem:[#allocation11 + $0x20] sm:$0xff]
    %v1245 = vld [vmem:[#allocation11 + $0x28] sm:$0xff]
    %v1246 = vld [vmem:[#allocation11 + $0x30] sm:$0xff]
    %v1247 = vld [vmem:[#allocation11 + $0x38] sm:$0xff]
    %v1248 = vld [vmem:[#allocation11 + $0x40] sm:$0xff]
    %v1249 = vld [vmem:[#allocation11 + $0x48] sm:$0xff]
    %v1250 = vld [vmem:[#allocation11 + $0x50] sm:$0xff]
    %v1251 = vld [vmem:[#allocation11 + $0x58] sm:$0xff]
    %v1252 = vld [vmem:[#allocation11 + $0x60] sm:$0xff]
    %v1253 = vld [vmem:[#allocation11 + $0x68] sm:$0xff]
    %v1254 = vld [vmem:[#allocation11 + $0x70] sm:$0xff]
    %v1255 = vld [vmem:[#allocation11 + $0x78] sm:$0xff]
    %v1257 = vlaneseq
    %v1258 = vshrl.u32 %v1257, 7
    %v1259 = vsub.s32 0, %v1258
    %v1260 = vrot.slane %v1238, %v1259
    %v1261 = vlaneseq
    %v1262 = vshrl.u32 %v1261, 7
    %v1263 = vsub.s32 1, %v1262
    %v1264 = vrot.slane %v1238, %v1263
    %v1283 = vunpack.c.l.b16 %v1240
    %v1284 = vunpack.c.h.b16 %v1240
    %v1285 = vunpack.c.l.b16 %v1241
    %v1286 = vunpack.c.h.b16 %v1241
    %v1287 = vunpack.c.l.b16 %v1242
    %v1288 = vunpack.c.h.b16 %v1242
    %v1289 = vunpack.c.l.b16 %v1243
    %v1290 = vunpack.c.h.b16 %v1243
    %v1291 = vunpack.c.l.b16 %v1244
    %v1292 = vunpack.c.h.b16 %v1244
    %v1293 = vunpack.c.l.b16 %v1245
    %v1294 = vunpack.c.h.b16 %v1245
    %v1295 = vunpack.c.l.b16 %v1246
    %v1296 = vunpack.c.h.b16 %v1246
    %v1297 = vunpack.c.l.b16 %v1247
    %v1298 = vunpack.c.h.b16 %v1247
    %v1299 = vunpack.c.l.b16 %v1248
    %v1300 = vunpack.c.h.b16 %v1248
    %v1301 = vunpack.c.l.b16 %v1249
    %v1302 = vunpack.c.h.b16 %v1249
    %v1303 = vunpack.c.l.b16 %v1250
    %v1304 = vunpack.c.h.b16 %v1250
    %v1305 = vunpack.c.l.b16 %v1251
    %v1306 = vunpack.c.h.b16 %v1251
    %v1307 = vunpack.c.l.b16 %v1252
    %v1308 = vunpack.c.h.b16 %v1252
    %v1309 = vunpack.c.l.b16 %v1253
    %v1310 = vunpack.c.h.b16 %v1253
    %v1311 = vunpack.c.l.b16 %v1254
    %v1312 = vunpack.c.h.b16 %v1254
    %v1313 = vunpack.c.l.b16 %v1255
    %v1314 = vunpack.c.h.b16 %v1255
    %v1315 = vpack.c.b16 %v1285, %v1283
    %v1316 = vpack.c.b16 %v1286, %v1284
    %v1317 = vpack.c.b16 %v1289, %v1287
    %v1318 = vpack.c.b16 %v1290, %v1288
    %v1319 = vpack.c.b16 %v1293, %v1291
    %v1320 = vpack.c.b16 %v1294, %v1292
    %v1321 = vpack.c.b16 %v1297, %v1295
    %v1322 = vpack.c.b16 %v1298, %v1296
    %v1323 = vpack.c.b16 %v1301, %v1299
    %v1324 = vpack.c.b16 %v1302, %v1300
    %v1325 = vpack.c.b16 %v1305, %v1303
    %v1326 = vpack.c.b16 %v1306, %v1304
    %v1327 = vpack.c.b16 %v1309, %v1307
    %v1328 = vpack.c.b16 %v1310, %v1308
    %v1329 = vpack.c.b16 %v1313, %v1311
    %v1330 = vpack.c.b16 %v1314, %v1312
    %1347 = vmatprep.subr.bf16.mxu0 %v1316
    %1348 = vmatpush1.bf16.msra.mxu0 %v1315
    %1349 = vmatprep.subr.bf16.mxu0 %v1318
    %1350 = vmatpush1.bf16.msra.mxu0 %v1317
    %1351 = vmatprep.subr.bf16.mxu0 %v1320
    %1352 = vmatpush1.bf16.msra.mxu0 %v1319
    %1353 = vmatprep.subr.bf16.mxu0 %v1322
    %1354 = vmatpush1.bf16.msra.mxu0 %v1321
    %1355 = vmatprep.subr.bf16.mxu0 %v1324
    %1356 = vmatpush1.bf16.msra.mxu0 %v1323
    %1357 = vmatprep.subr.bf16.mxu0 %v1326
    %1358 = vmatpush1.bf16.msra.mxu0 %v1325
    %1359 = vmatprep.subr.bf16.mxu0 %v1328
    %1360 = vmatpush1.bf16.msra.mxu0 %v1327
    %1361 = vmatprep.subr.bf16.mxu0 %v1330
    %1362 = vmatpush1.bf16.msra.mxu0 %v1329
    %1363 = vmatprep.subr.bf16.mxu0 0
    %1364 = vmatpush1.bf16.msra.mxu0 0
    %1365 = vmatprep.subr.bf16.mxu0 0
    %1366 = vmatpush1.bf16.msra.mxu0 0
    %1367 = vmatprep.subr.bf16.mxu0 0
    %1368 = vmatpush1.bf16.msra.mxu0 0
    %1369 = vmatprep.subr.bf16.mxu0 0
    %1370 = vmatpush1.bf16.msra.mxu0 0
    %1371 = vmatprep.subr.bf16.mxu0 0
    %1372 = vmatpush1.bf16.msra.mxu0 0
    %1373 = vmatprep.subr.bf16.mxu0 0
    %1374 = vmatpush1.bf16.msra.mxu0 0
    %1375 = vmatprep.subr.bf16.mxu0 0
    %1376 = vmatpush1.bf16.msra.mxu0 0
    %1377 = vmatprep.subr.bf16.mxu0 0
    %1378 = vmatpush1.bf16.msra.mxu0 0
    %1379 = vmatprep.mubr.bf16.mxu0 0
    %1380 = vmatmul.mubr.bf16.gmra.mrb[0].mxu0 %v1239
    %v1381 = vpop.f32.mrb[0].mxu0
    %v1382 = vadd.f32 %v1260, %v1381
    %v1383 = vpop.f32.mrb[0].mxu0
    %v1384 = vadd.f32 %v1264, %v1383
    %v1385 = vpop.f32.mrb[0].mxu0
    %v1386 = vadd.f32 %v1260, %v1385
    %v1387 = vpop.f32.mrb[0].mxu0
    %v1388 = vadd.f32 %v1264, %v1387
    %1389 = vdwg.mxu0
    %v1390 = vmul.f32 %v1382, 0.2
    %v1391 = vmul.f32 %v1384, 0.2
    %v1392 = vmul.f32 %v1386, 0.2
    %v1393 = vmul.f32 %v1388, 0.2
    %v1394 = vmax.f32 %v1382, %v1390
    %v1395 = vmax.f32 %v1384, %v1391
    %v1396 = vmax.f32 %v1386, %v1392
    %v1397 = vmax.f32 %v1388, %v1393
    %v1398 = vld [vmem:[%s7 + $0xa] sm:$0x1]
    %v1399 = vpack.c.bf16 %v1396, %v1394
    %v1400 = vpack.c.bf16 %v1397, %v1395
    %v1401 = vld [vmem:[#allocation13] sm:$0xf]
    %v1402 = vld [vmem:[#allocation13 + $0x4] sm:$0xf]
    %v1403 = vld [vmem:[#allocation13 + $0x8] sm:$0xf]
    %v1404 = vld [vmem:[#allocation13 + $0xc] sm:$0xf]
    %v1405 = vld [vmem:[#allocation13 + $0x10] sm:$0xf]
    %v1406 = vld [vmem:[#allocation13 + $0x14] sm:$0xf]
    %v1407 = vld [vmem:[#allocation13 + $0x18] sm:$0xf]
    %v1408 = vld [vmem:[#allocation13 + $0x1c] sm:$0xf]
    %v1409 = vld [vmem:[#allocation13 + $0x20] sm:$0xf]
    %v1410 = vld [vmem:[#allocation13 + $0x24] sm:$0xf]
    %v1411 = vld [vmem:[#allocation13 + $0x28] sm:$0xf]
    %v1412 = vld [vmem:[#allocation13 + $0x2c] sm:$0xf]
    %v1413 = vld [vmem:[#allocation13 + $0x30] sm:$0xf]
    %v1414 = vld [vmem:[#allocation13 + $0x34] sm:$0xf]
    %v1415 = vld [vmem:[#allocation13 + $0x38] sm:$0xf]
    %v1416 = vld [vmem:[#allocation13 + $0x3c] sm:$0xf]
    %v1417 = vld [vmem:[#allocation13 + $0x40] sm:$0xf]
    %v1418 = vld [vmem:[#allocation13 + $0x44] sm:$0xf]
    %v1419 = vld [vmem:[#allocation13 + $0x48] sm:$0xf]
    %v1420 = vld [vmem:[#allocation13 + $0x4c] sm:$0xf]
    %v1421 = vld [vmem:[#allocation13 + $0x50] sm:$0xf]
    %v1422 = vld [vmem:[#allocation13 + $0x54] sm:$0xf]
    %v1423 = vld [vmem:[#allocation13 + $0x58] sm:$0xf]
    %v1424 = vld [vmem:[#allocation13 + $0x5c] sm:$0xf]
    %v1425 = vld [vmem:[#allocation13 + $0x60] sm:$0xf]
    %v1426 = vld [vmem:[#allocation13 + $0x64] sm:$0xf]
    %v1427 = vld [vmem:[#allocation13 + $0x68] sm:$0xf]
    %v1428 = vld [vmem:[#allocation13 + $0x6c] sm:$0xf]
    %v1429 = vld [vmem:[#allocation13 + $0x70] sm:$0xf]
    %v1430 = vld [vmem:[#allocation13 + $0x74] sm:$0xf]
    %v1431 = vld [vmem:[#allocation13 + $0x78] sm:$0xf]
    %v1432 = vld [vmem:[#allocation13 + $0x7c] sm:$0xf]
    %v1434 = vlaneseq
    %v1435 = vshrl.u32 %v1434, 7
    %v1436 = vsub.s32 0, %v1435
    %v1437 = vrot.slane %v1398, %v1436
    %v1471 = vunpack.c.l.b16 %v1401
    %v1472 = vunpack.c.l.b16 %v1402
    %v1473 = vunpack.c.l.b16 %v1403
    %v1474 = vunpack.c.l.b16 %v1404
    %v1475 = vunpack.c.l.b16 %v1405
    %v1476 = vunpack.c.l.b16 %v1406
    %v1477 = vunpack.c.l.b16 %v1407
    %v1478 = vunpack.c.l.b16 %v1408
    %v1479 = vunpack.c.l.b16 %v1409
    %v1480 = vunpack.c.l.b16 %v1410
    %v1481 = vunpack.c.l.b16 %v1411
    %v1482 = vunpack.c.l.b16 %v1412
    %v1483 = vunpack.c.l.b16 %v1413
    %v1484 = vunpack.c.l.b16 %v1414
    %v1485 = vunpack.c.l.b16 %v1415
    %v1486 = vunpack.c.l.b16 %v1416
    %v1487 = vunpack.c.l.b16 %v1417
    %v1488 = vunpack.c.l.b16 %v1418
    %v1489 = vunpack.c.l.b16 %v1419
    %v1490 = vunpack.c.l.b16 %v1420
    %v1491 = vunpack.c.l.b16 %v1421
    %v1492 = vunpack.c.l.b16 %v1422
    %v1493 = vunpack.c.l.b16 %v1423
    %v1494 = vunpack.c.l.b16 %v1424
    %v1495 = vunpack.c.l.b16 %v1425
    %v1496 = vunpack.c.l.b16 %v1426
    %v1497 = vunpack.c.l.b16 %v1427
    %v1498 = vunpack.c.l.b16 %v1428
    %v1499 = vunpack.c.l.b16 %v1429
    %v1500 = vunpack.c.l.b16 %v1430
    %v1501 = vunpack.c.l.b16 %v1431
    %v1502 = vunpack.c.l.b16 %v1432
    %v1503 = vpack.c.b16 %v1472, %v1471
    %v1504 = vpack.c.b16 %v1474, %v1473
    %v1505 = vpack.c.b16 %v1476, %v1475
    %v1506 = vpack.c.b16 %v1478, %v1477
    %v1507 = vpack.c.b16 %v1480, %v1479
    %v1508 = vpack.c.b16 %v1482, %v1481
    %v1509 = vpack.c.b16 %v1484, %v1483
    %v1510 = vpack.c.b16 %v1486, %v1485
    %v1511 = vpack.c.b16 %v1488, %v1487
    %v1512 = vpack.c.b16 %v1490, %v1489
    %v1513 = vpack.c.b16 %v1492, %v1491
    %v1514 = vpack.c.b16 %v1494, %v1493
    %v1515 = vpack.c.b16 %v1496, %v1495
    %v1516 = vpack.c.b16 %v1498, %v1497
    %v1517 = vpack.c.b16 %v1500, %v1499
    %v1518 = vpack.c.b16 %v1502, %v1501
    %1535 = vmatprep.subr.bf16.mxu0 0
    %1536 = vmatpush1.bf16.msra.mxu0 %v1503
    %1537 = vmatprep.subr.bf16.mxu0 0
    %1538 = vmatpush1.bf16.msra.mxu0 %v1504
    %1539 = vmatprep.subr.bf16.mxu0 0
    %1540 = vmatpush1.bf16.msra.mxu0 %v1505
    %1541 = vmatprep.subr.bf16.mxu0 0
    %1542 = vmatpush1.bf16.msra.mxu0 %v1506
    %1543 = vmatprep.subr.bf16.mxu0 0
    %1544 = vmatpush1.bf16.msra.mxu0 %v1507
    %1545 = vmatprep.subr.bf16.mxu0 0
    %1546 = vmatpush1.bf16.msra.mxu0 %v1508
    %1547 = vmatprep.subr.bf16.mxu0 0
    %1548 = vmatpush1.bf16.msra.mxu0 %v1509
    %1549 = vmatprep.subr.bf16.mxu0 0
    %1550 = vmatpush1.bf16.msra.mxu0 %v1510
    %1551 = vmatprep.subr.bf16.mxu0 0
    %1552 = vmatpush1.bf16.msra.mxu0 %v1511
    %1553 = vmatprep.subr.bf16.mxu0 0
    %1554 = vmatpush1.bf16.msra.mxu0 %v1512
    %1555 = vmatprep.subr.bf16.mxu0 0
    %1556 = vmatpush1.bf16.msra.mxu0 %v1513
    %1557 = vmatprep.subr.bf16.mxu0 0
    %1558 = vmatpush1.bf16.msra.mxu0 %v1514
    %1559 = vmatprep.subr.bf16.mxu0 0
    %1560 = vmatpush1.bf16.msra.mxu0 %v1515
    %1561 = vmatprep.subr.bf16.mxu0 0
    %1562 = vmatpush1.bf16.msra.mxu0 %v1516
    %1563 = vmatprep.subr.bf16.mxu0 0
    %1564 = vmatpush1.bf16.msra.mxu0 %v1517
    %1565 = vmatprep.subr.bf16.mxu0 0
    %1566 = vmatpush1.bf16.msra.mxu0 %v1518
    %1567 = vmatprep.mubr.bf16.mxu0 %v1400
    %1568 = vmatmul.mubr.bf16.gmra.mrb[0].mxu0 %v1399
    %v1569 = vpop.f32.mrb[0].mxu0
    %v1570 = vadd.f32 %v1437, %v1569
    %v1571 = vpop.f32.mrb[0].mxu0
    %v1572 = vpop.f32.mrb[0].mxu0
    %v1573 = vadd.f32 %v1437, %v1572
    %v1574 = vpop.f32.mrb[0].mxu0
    %1575 = vdwg.mxu0
    %v1576 = vmul.f32 %v1570, 0.5
    %v1577 = vmul.f32 %v1573, 0.5
    %v1578 = vtanh.pop %v1576
    %v1579 = vtanh.pop %v1577
    %v1580 = vmul.f32 %v1578, 0.5
    %v1581 = vmul.f32 %v1579, 0.5
    %v1582 = vadd.f32 %v1580, 0.5
    %v1583 = vadd.f32 %v1581, 0.5
    %1584 = vst [vmem:[#allocation14] sm:$0xff] %v1582
    %1585 = vst [vmem:[#allocation14 + $0x8] sm:$0xff] %v1583
    // Predicated region
    $region62: #{ae_forward.1} parent=1 // pred_check
      _
    $region63: #{ae_forward.1} parent=1 // pred_check_branch
      %1587 = sbr.rel (0) target = $region65
    $region64: #{ae_forward.1} parent=1 // pred_region
      %s1589 = ssub.s32 256, 256
      %1590 = vsyncadd [#allocation4], %s1589
      %s1591 = sshll.u32 [#allocation14], 4
      %s1592 = int_to_ptr.vmem [resolvable:$true] %s1591
      %1597 = dma.vmem_to_hbm [thread:$0]  %s1592, 256, %s8, [#allocation4], 128, 128, 8
    $region65: #{ae_forward.1} parent=1 // pred_fallthru
      _
    // Predicated region
    $region66: #{ae_forward.1} parent=1 // pred_check
      _
    $region67: #{ae_forward.1} parent=1 // pred_check_branch
      %1599 = sbr.rel (0) target = $region69
    $region68: #{ae_forward.1} parent=1 // pred_region
      %1600 = dma.done [#allocation4], 256
    $region69: #{ae_forward.1} parent=1 // pred_fallthru
      _
    %1601 = vsyncpa [#allocation3], 1
    %1602 = vsyncpa [#allocation6], 1
    %1603 = vsyncpa [#allocation9], 1
    %1604 = vsyncpa [#allocation12], 1
    %1605 = vsyncpa [#allocation4], 1

</llo_original>
